<compile_context>
chip_gen: v7x
topology: tpu7x:2x2x1
jax: 0.10.0
libtpu: 0.0.40
codegen_flags: <defaults>
</compile_context>

<pallas_src>
import numpy as np
import jax
import jax.numpy as jnp
from jax import lax
from jax.experimental import pallas as pl
from jax.experimental.pallas import tpu as pltpu

# ----------------------------------------------------------------------------
# Group tables (constants from the PyTorch module)
# ----------------------------------------------------------------------------
OCTAHEDRON_ROTS = np.array(
    [[[1, 0, 0], [0, 1, 0], [0, 0, 1]], [[1, 0, 0], [0, 0, -1], [0, 1, 0]],
     [[1, 0, 0], [0, -1, 0], [0, 0, -1]], [[1, 0, 0], [0, 0, 1], [0, -1, 0]],
     [[0, 0, 1], [0, 1, 0], [-1, 0, 0]], [[-1, 0, 0], [0, 1, 0], [0, 0, -1]],
     [[0, 0, -1], [0, 1, 0], [1, 0, 0]], [[0, -1, 0], [1, 0, 0], [0, 0, 1]],
     [[-1, 0, 0], [0, -1, 0], [0, 0, 1]], [[0, 1, 0], [-1, 0, 0], [0, 0, 1]],
     [[0, 1, 0], [1, 0, 0], [0, 0, -1]], [[0, -1, 0], [-1, 0, 0], [0, 0, -1]],
     [[0, 0, 1], [0, -1, 0], [1, 0, 0]], [[0, 0, -1], [0, -1, 0], [-1, 0, 0]],
     [[-1, 0, 0], [0, 0, 1], [0, 1, 0]], [[-1, 0, 0], [0, 0, -1], [0, -1, 0]],
     [[0., 0., 1.], [1., 0., 0.], [0., 1., 0.]],
     [[0., 1., 0.], [0., 0., 1.], [1., 0., 0.]],
     [[0., -1., 0.], [0., -0., -1.], [1., 0., 0.]],
     [[0., 0., 1.], [-1., 0., 0.], [0., -1., 0.]],
     [[0., 0., -1.], [1., 0., 0.], [0., -1., 0.]],
     [[0., 1., 0.], [0., 0., -1.], [-1., 0., 0.]],
     [[0., -1., 0.], [0., 0., 1.], [-1., 0., 0.]],
     [[0., 0., -1.], [-1., 0., 0.], [0., 1., 0.]]], dtype=np.float64)

REFL_OCTAHEDRON_ROTS = np.concatenate(
    [OCTAHEDRON_ROTS,
     np.array(
         [[[1., 0., 0.], [0., 1., 0.], [0., 0., -1.]],
          [[1., 0., 0.], [0., -1., 0.], [0., 0., 1.]],
          [[-1., 0., 0.], [0., 1., 0.], [0., 0., 1.]],
          [[1., 0., 0.], [0., 0., -1.], [0., -1., 0.]],
          [[1., 0., 0.], [0., 0., 1.], [0., 1., 0.]],
          [[-1., 0., 0.], [0., 0., 1.], [0., -1., 0.]],
          [[-1., 0., 0.], [0., -1., 0.], [0., 0., -1.]],
          [[-1., 0., 0.], [0., 0., -1.], [0., 1., 0.]],
          [[0., 0., 1.], [0., 1., 0.], [1., 0., 0.]],
          [[0., 0., -1.], [0., -1., 0.], [1., 0., 0.]],
          [[0., 0., -1.], [0., 1., 0.], [-1., 0., 0.]],
          [[0., 1., 0.], [0., 0., -1.], [1., 0., 0.]],
          [[0., -1., 0.], [0., 0., 1.], [1., 0., 0.]],
          [[0., 1., 0.], [0., 0., 1.], [-1., 0., 0.]],
          [[0., 0., 1.], [0., -1., 0.], [-1., 0., 0.]],
          [[0., -1., 0.], [0., 0., -1.], [-1., 0., 0.]],
          [[0., 1., 0.], [1., 0., 0.], [0., 0., 1.]],
          [[0., -1., 0.], [1., 0., 0.], [0., 0., -1.]],
          [[0., 1., 0.], [-1., 0., 0.], [0., 0., -1.]],
          [[0., 0., -1.], [1., 0., 0.], [0., 1., 0.]],
          [[0., 0., 1.], [1., 0., 0.], [0., -1., 0.]],
          [[0., 0., 1.], [-1., 0., 0.], [0., 1., 0.]],
          [[0., -1., 0.], [-1., 0., 0.], [0., 0., 1.]],
          [[0., 0., -1.], [-1., 0., 0.], [0., -1., 0.]]], dtype=np.float64)],
    axis=0)


# ----------------------------------------------------------------------------
# Host-side (cached) analysis of the affine_grid + grid_sample operator
# ----------------------------------------------------------------------------
def _signed_perm_info(R_inv, D, H, W):
    """If the sampling is an exact on-grid voxel permutation, return
    (src_out_axis, flip): for each input spatial axis a in (D,H,W) order, the
    output spatial axis (z,y,x order) that feeds its coordinate, and whether
    the coordinate is reversed.  Otherwise return None."""
    Ri = np.asarray(R_inv, dtype=np.float64)
    size_rc = [W, H, D]            # row r samples input axis of this size;
    col, neg = [-1, -1, -1], [False, False, False]
    for r in range(3):
        nz = np.nonzero(np.abs(Ri[r]) > 1e-6)[0]
        if len(nz) != 1:
            return None
        j = int(nz[0])
        v = float(Ri[r, j])
        if abs(abs(v) - 1.0) > 1e-6:
            return None
        if size_rc[r] != size_rc[j]:   # pairing unequal axes -> interpolation
            return None
        col[r], neg[r] = j, v < 0.0
    if sorted(col) != [0, 1, 2]:
        return None
    # input array axis a (0=D,1=H,2=W) <-> row r = 2-a ; output axis o <-> col 2-o
    src_out_axis = [2 - col[2 - a] for a in range(3)]
    flip = [neg[2 - a] for a in range(3)]
    return src_out_axis, flip


def _trilinear_taps_np(R_inv, D, H, W):
    """8 (flat source index, weight) arrays per output voxel — exact
    affine_grid(align_corners=False) + grid_sample(zeros) semantics."""
    def base(S):
        return (2.0 * np.arange(S) + 1.0) / S - 1.0
    bz, by, bx = np.meshgrid(base(D), base(H), base(W), indexing='ij')
    g = np.stack([bx, by, bz], -1).reshape(-1, 3) @ np.asarray(R_inv, np.float64).T
    ix = ((g[:, 0] + 1.0) * W - 1.0) / 2.0
    iy = ((g[:, 1] + 1.0) * H - 1.0) / 2.0
    iz = ((g[:, 2] + 1.0) * D - 1.0) / 2.0
    x0 = np.floor(ix).astype(np.int64)
    y0 = np.floor(iy).astype(np.int64)
    z0 = np.floor(iz).astype(np.int64)
    tx, ty, tz = ix - x0, iy - y0, iz - z0
    taps = []
    for cz in (0, 1):
        for cy in (0, 1):
            for cx in (0, 1):
                zi, yi, xi = z0 + cz, y0 + cy, x0 + cx
                w = ((tz if cz else 1.0 - tz) * (ty if cy else 1.0 - ty) *
                     (tx if cx else 1.0 - tx))
                valid = ((zi >= 0) & (zi < D) & (yi >= 0) & (yi < H) &
                         (xi >= 0) & (xi < W))
                src = ((np.clip(zi, 0, D - 1) * H + np.clip(yi, 0, H - 1)) * W +
                       np.clip(xi, 0, W - 1))
                taps.append((src, np.where(valid, w, 0.0)))
    return taps


def _build_dense_MT_np(R_inv, D, H, W):
    P = D * H * W
    MT = np.zeros((P, P), np.float32)
    cols = np.arange(P)
    for src, w in _trilinear_taps_np(R_inv, D, H, W):
        np.add.at(MT, (src, cols), w)
    return MT                                   # out = X @ MT


def _round_up(a, b):
    return (a + b - 1) // b * b


# ----------------------------------------------------------------------------
# Exact-permutation Pallas kernel (the standard, cubic-volume case)
# ----------------------------------------------------------------------------
def _make_permutation_fn(src_out_axis, flip, D, H, W):
    sizes = (D, H, W)
    F = src_out_axis.index(0)             # input axis whose coord comes from out-z
    a_y = src_out_axis.index(1)           # input axis fed by out-y
    a_x = src_out_axis.index(2)           # input axis fed by out-x
    plane_axes = [a for a in range(3) if a != F]
    swapped = plane_axes.index(a_y) == 1  # out-y reads the plane's minor axis
    flip_F = flip[F]
    P0, P1 = sizes[plane_axes[0]], sizes[plane_axes[1]]

    ay_np = np.eye(sizes[a_y], dtype=np.float32)
    if flip[a_y]:
        ay_np = np.ascontiguousarray(ay_np[::-1])       # Ay[y, k]=1 at k=L-1-y
    bx_np = np.eye(sizes[a_x], dtype=np.float32)
    if flip[a_x]:
        bx_np = np.ascontiguousarray(bx_np[:, ::-1])    # Bx[k, x]=1 at k=L-1-x

    @jax.jit
    def fn(x4):                                   # (NC, D, H, W) float32
        NC = x4.shape[0]

        def kernel(x_ref, ay_ref, bx_ref, o_ref, scratch):
            i = pl.program_id(0)
            aym = ay_ref[...]
            bxm = bx_ref[...]
            if F != 0:
                s = (sizes[F] - 1 - i) if flip_F else i
                e = (lax.broadcasted_iota(jnp.int32, (1, sizes[F]), 1) == s
                     ).astype(jnp.float32)        # one-hot selector (hoisted)
            for n in range(NC):
                if F == 0:
                    plane = x_ref[n, 0]                            # (H, W)
                else:
                    # Build the source plane (P0, P1) row by row: each row is a
                    # one-hot MXU selection along the sliced (H or W) axis.
                    for d in range(D):
                        sl = x_ref[n, d]                           # (H, W)
                        if F == 1:
                            row = jnp.dot(e, sl,
                                          preferred_element_type=jnp.float32)
                        else:                                      # F == 2
                            row = lax.dot_general(
                                e, sl, (((1,), (1,)), ((), ())),
                                preferred_element_type=jnp.float32)
                        scratch[pl.ds(d, 1), :] = row
                    plane = scratch[...]                           # (P0, P1)
                if swapped:
                    t = lax.dot_general(
                        aym, plane, (((1,), (1,)), ((), ())),
                        preferred_element_type=jnp.float32)        # (H, P0)
                else:
                    t = jnp.dot(aym, plane,
                                preferred_element_type=jnp.float32)  # (H, P1)
                o_ref[n, 0, :, :] = jnp.dot(
                    t, bxm, preferred_element_type=jnp.float32)    # (H, W)

        if F == 0:
            if flip_F:
                x_spec = pl.BlockSpec((NC, 1, H, W),
                                      lambda i: (0, D - 1 - i, 0, 0))
            else:
                x_spec = pl.BlockSpec((NC, 1, H, W), lambda i: (0, i, 0, 0))
        else:
            # TODO(synk): for very large volumes keep only a D-tile resident.
            x_spec = pl.BlockSpec((NC, D, H, W), lambda i: (0, 0, 0, 0))

        return pl.pallas_call(
            kernel,
            out_shape=jax.ShapeDtypeStruct((NC, D, H, W), jnp.float32),
            grid=(D,),
            in_specs=[x_spec,
                      pl.BlockSpec(ay_np.shape, lambda i: (0, 0)),
                      pl.BlockSpec(bx_np.shape, lambda i: (0, 0))],
            out_specs=pl.BlockSpec((NC, 1, H, W), lambda i: (0, i, 0, 0)),
            scratch_shapes=[pltpu.VMEM((P0, P1), jnp.float32)],
            compiler_params=pltpu.CompilerParams(
                dimension_semantics=("arbitrary",)),
        )(x4, jnp.asarray(ay_np), jnp.asarray(bx_np))

    return fn


# ----------------------------------------------------------------------------
# Dense fallback kernel (only when real trilinear interpolation is required)
# ----------------------------------------------------------------------------
def _dense_kernel(x_ref, mt_ref, o_ref):
    o_ref[...] = jnp.dot(x_ref[...], mt_ref[...],
                         preferred_element_type=jnp.float32)


def _make_dense_fn(MT, D, H, W):
    P = D * H * W
    P_pad = _round_up(P, 256)
    TN = P_pad if P_pad <= 512 else 256      # single block for small problems
    MT_p = np.zeros((P_pad, P_pad), np.float32)
    MT_p[:P, :P] = MT
    MT_j = jnp.asarray(MT_p)

    @jax.jit
    def fn(x4):                                   # (NC, D, H, W) float32
        NC = x4.shape[0]
        NC_p = max(_round_up(NC, 8), 8)
        Xf = x4.reshape(NC, P)
        if NC_p != NC or P_pad != P:
            Xp = jnp.zeros((NC_p, P_pad), jnp.float32).at[:NC, :P].set(Xf)
        else:
            Xp = Xf
        out = pl.pallas_call(
            _dense_kernel,
            out_shape=jax.ShapeDtypeStruct((NC_p, P_pad), jnp.float32),
            grid=(P_pad // TN,),
            in_specs=[pl.BlockSpec((NC_p, P_pad), lambda j: (0, 0)),
                      pl.BlockSpec((P_pad, TN), lambda j: (0, j))],
            out_specs=pl.BlockSpec((NC_p, TN), lambda j: (0, j)),
            compiler_params=pltpu.CompilerParams(
                dimension_semantics=("arbitrary",)),
        )(Xp, MT_j)
        return out[:NC, :P].reshape(NC, D, H, W)

    return fn


# ----------------------------------------------------------------------------
# Module port
# ----------------------------------------------------------------------------
def compute_l1_spherical_harmonics_real(R):
    d = np.array([1, 0, 0])
    dr = np.dot(R, d)
    theta = np.arccos(dr[1])
    phi = np.arctan2(dr[0], dr[2])
    c = np.sqrt(3.0 / (4.0 * np.pi))
    return (c * np.sin(theta) * np.sin(phi), c * np.cos(theta),
            c * np.sin(theta) * np.cos(phi))


class OctahedralTransform:
    """JAX/Pallas port of the PyTorch `octahedral_transform` module."""

    def __init__(self, reflection=False):
        self.octahedron_rots = (REFL_OCTAHEDRON_ROTS if reflection
                                else OCTAHEDRON_ROTS)
        shifted = []
        for g in range(len(self.octahedron_rots)):
            out = np.einsum('xy,nyz->nxz',
                            np.linalg.inv(self.octahedron_rots[g]),
                            self.octahedron_rots)
            idx = []
            for i in range(len(self.octahedron_rots)):
                match = np.where(np.all(
                    np.abs(out[i] - self.octahedron_rots) < 1e-6,
                    axis=(1, 2)))[0]
                idx.append(int(match[0]))
            shifted.append(idx)
        self.shifted_indices = np.array(shifted)
        self._fn_cache = {}

    def l1_spherical_harmonics_real(self):
        return np.array([compute_l1_spherical_harmonics_real(R)
                         for R in self.octahedron_rots], dtype=np.float32)

    def __call__(self, input_tensor, element):
        element = int(element)               # must be concrete (as in PyTorch)
        N, C, D, H, W = input_tensor.shape
        key = (element, D, H, W)
        fn = self._fn_cache.get(key)
        if fn is None:
            R_inv = np.linalg.inv(self.octahedron_rots[element]).astype(np.float32)
            info = _signed_perm_info(R_inv, D, H, W)
            if info is not None:
                fn = _make_permutation_fn(info[0], info[1], D, H, W)
            else:
                fn = _make_dense_fn(_build_dense_MT_np(R_inv, D, H, W), D, H, W)
            self._fn_cache[key] = fn
        x4 = input_tensor.reshape(N * C, D, H, W).astype(jnp.float32)
        out = fn(x4)
        return out.reshape(N, C, D, H, W).astype(input_tensor.dtype)


octahedral_transform = OctahedralTransform   # name alias matching the module


# ----------------------------------------------------------------------------
# Independent numpy reference of affine_grid + grid_sample
# ----------------------------------------------------------------------------
def _reference_grid_sample_np(x, R_inv):
    x = np.asarray(x, np.float64)
    N, C, D, H, W = x.shape
    P = D * H * W
    xf = x.reshape(N, C, P)
    out = np.zeros((N, C, P), np.float64)
    for src, w in _trilinear_taps_np(R_inv, D, H, W):
        out += xf[:, :, src] * w[None, None, :]
    return out.reshape(N, C, D, H, W).astype(np.float32)


if __name__ == "__main__":
    key = jax.random.PRNGKey(0)
    # 5-D volumetric input (N, C, D, H, W) as implied by the 3x4 affine grid.
    x = jax.random.normal(key, (2, 4, 8, 8, 8), dtype=jnp.float32)

    xform = OctahedralTransform(reflection=False)
    out = jax.block_until_ready(xform(x, 7))
    assert out.shape == x.shape and out.dtype == x.dtype

    x_np = np.asarray(x)
    # Elements covering every structural kernel case (F axis / swap / flips).
    for elem in (0, 1, 4, 7, 16, 21):
        o = np.asarray(jax.block_until_ready(xform(x, elem)))
        ref = _reference_grid_sample_np(
            x_np, np.linalg.inv(xform.octahedron_rots[elem]))
        assert np.allclose(o, ref, atol=1e-5, rtol=1e-5), f"element {elem}"

    # Reflection table (full inversion).
    xform_r = OctahedralTransform(reflection=True)
    o = np.asarray(jax.block_until_ready(xform_r(x, 30)))
    ref = _reference_grid_sample_np(
        x_np, np.linalg.inv(xform_r.octahedron_rots[30]))
    assert np.allclose(o, ref, atol=1e-5, rtol=1e-5)

    # Non-cubic volume: rotation mixes unequal axes -> dense interpolating path.
    x2 = jax.random.normal(jax.random.PRNGKey(1), (1, 2, 4, 8, 8),
                           dtype=jnp.float32)
    o2 = np.asarray(jax.block_until_ready(xform(x2, 1)))
    ref2 = _reference_grid_sample_np(
        np.asarray(x2), np.linalg.inv(xform.octahedron_rots[1]))
    assert np.allclose(o2, ref2, atol=1e-4, rtol=1e-4)

    print("KERNEL_OK")
</pallas_src>

<mosaic_0001>
module attributes {stable_mosaic.version = 11 : i64} {
  func.func @kernel(%arg0: i32, %arg1: memref<8x1x8x8xf32, #tpu.memory_space<vmem>>, %arg2: memref<8x8xf32, #tpu.memory_space<vmem>>, %arg3: memref<8x8xf32, #tpu.memory_space<vmem>>, %arg4: memref<8x1x8x8xf32, #tpu.memory_space<vmem>>, %arg5: memref<8x8xf32, #tpu.memory_space<vmem>>) attributes {dimension_semantics = [#tpu.dimension_semantics<arbitrary>], iteration_bounds = array<i64: 8>, scalar_prefetch = 0 : i64, scratch_operands = 1 : i64, tpu.core_type = #tpu.core_type<tc>, window_params = [{transform_indices = @transform_0, window_bounds = array<i64: 8, 1, 8, 8>}, {pipeline_mode = #tpu.pipeline_mode<synchronous>, transform_indices = @transform_1, window_bounds = array<i64: 8, 8>}, {pipeline_mode = #tpu.pipeline_mode<synchronous>, transform_indices = @transform_2, window_bounds = array<i64: 8, 8>}, {transform_indices = @transform_3, window_bounds = array<i64: 8, 1, 8, 8>}]} {
    %c0 = arith.constant 0 : index
    %c0_0 = arith.constant 0 : index
    %0 = vector.load %arg2[%c0, %c0_0] : memref<8x8xf32, #tpu.memory_space<vmem>>, vector<8x8xf32>
    %c0_1 = arith.constant 0 : index
    %c0_2 = arith.constant 0 : index
    %1 = vector.load %arg3[%c0_1, %c0_2] : memref<8x8xf32, #tpu.memory_space<vmem>>, vector<8x8xf32>
    %c0_3 = arith.constant 0 : index
    %c0_4 = arith.constant 0 : index
    %c0_5 = arith.constant 0 : index
    %c0_6 = arith.constant 0 : index
    %2 = vector.load %arg1[%c0_3, %c0_4, %c0_5, %c0_6] : memref<8x1x8x8xf32, #tpu.memory_space<vmem>>, vector<1x1x8x8xf32>
    %3 = vector.shape_cast %2 : vector<1x1x8x8xf32> to vector<8x8xf32>
    %cst = arith.constant dense<0.000000e+00> : vector<8x8xf32>
    %4 = tpu.matmul %0, %3, %cst {dimension_numbers = #tpu.dot_dimension_numbers<[1], [1], [0], [0], [0, 0, 1, 0], [], []>} : vector<8x8xf32>, vector<8x8xf32>, vector<8x8xf32> -> vector<8x8xf32>
    %cst_7 = arith.constant dense<0.000000e+00> : vector<8x8xf32>
    %5 = tpu.matmul %4, %1, %cst_7 {dimension_numbers = #tpu.dot_dimension_numbers<[1], [0], [0], [1], [0, 0, 1, 1], [], []>} : vector<8x8xf32>, vector<8x8xf32>, vector<8x8xf32> -> vector<8x8xf32>
    %c0_8 = arith.constant 0 : index
    %c0_9 = arith.constant 0 : index
    %c0_10 = arith.constant 0 : index
    %c0_11 = arith.constant 0 : index
    %6 = vector.load %arg4[%c0_8, %c0_9, %c0_10, %c0_11] : memref<8x1x8x8xf32, #tpu.memory_space<vmem>>, vector<1x1x8x8xf32>
    %7 = vector.shape_cast %6 : vector<1x1x8x8xf32> to vector<8x8xf32>
    %8 = vector.shape_cast %5 : vector<8x8xf32> to vector<1x1x8x8xf32>
    tpu.vector_store %arg4[%c0_8, %c0_9, %c0_10, %c0_11], %8 {strides = array<i32>} : memref<8x1x8x8xf32, #tpu.memory_space<vmem>>, vector<1x1x8x8xf32>,
    %c1 = arith.constant 1 : index
    %c0_12 = arith.constant 0 : index
    %c0_13 = arith.constant 0 : index
    %c0_14 = arith.constant 0 : index
    %9 = vector.load %arg1[%c1, %c0_12, %c0_13, %c0_14] : memref<8x1x8x8xf32, #tpu.memory_space<vmem>>, vector<1x1x8x8xf32>
    %10 = vector.shape_cast %9 : vector<1x1x8x8xf32> to vector<8x8xf32>
    %cst_15 = arith.constant dense<0.000000e+00> : vector<8x8xf32>
    %11 = tpu.matmul %0, %10, %cst_15 {dimension_numbers = #tpu.dot_dimension_numbers<[1], [1], [0], [0], [0, 0, 1, 0], [], []>} : vector<8x8xf32>, vector<8x8xf32>, vector<8x8xf32> -> vector<8x8xf32>
    %cst_16 = arith.constant dense<0.000000e+00> : vector<8x8xf32>
    %12 = tpu.matmul %11, %1, %cst_16 {dimension_numbers = #tpu.dot_dimension_numbers<[1], [0], [0], [1], [0, 0, 1, 1], [], []>} : vector<8x8xf32>, vector<8x8xf32>, vector<8x8xf32> -> vector<8x8xf32>
    %c1_17 = arith.constant 1 : index
    %c0_18 = arith.constant 0 : index
    %c0_19 = arith.constant 0 : index
    %c0_20 = arith.constant 0 : index
    %13 = vector.load %arg4[%c1_17, %c0_18, %c0_19, %c0_20] : memref<8x1x8x8xf32, #tpu.memory_space<vmem>>, vector<1x1x8x8xf32>
    %14 = vector.shape_cast %13 : vector<1x1x8x8xf32> to vector<8x8xf32>
    %15 = vector.shape_cast %12 : vector<8x8xf32> to vector<1x1x8x8xf32>
    tpu.vector_store %arg4[%c1_17, %c0_18, %c0_19, %c0_20], %15 {strides = array<i32>} : memref<8x1x8x8xf32, #tpu.memory_space<vmem>>, vector<1x1x8x8xf32>,
    %c2 = arith.constant 2 : index
    %c0_21 = arith.constant 0 : index
    %c0_22 = arith.constant 0 : index
    %c0_23 = arith.constant 0 : index
    %16 = vector.load %arg1[%c2, %c0_21, %c0_22, %c0_23] : memref<8x1x8x8xf32, #tpu.memory_space<vmem>>, vector<1x1x8x8xf32>
    %17 = vector.shape_cast %16 : vector<1x1x8x8xf32> to vector<8x8xf32>
    %cst_24 = arith.constant dense<0.000000e+00> : vector<8x8xf32>
    %18 = tpu.matmul %0, %17, %cst_24 {dimension_numbers = #tpu.dot_dimension_numbers<[1], [1], [0], [0], [0, 0, 1, 0], [], []>} : vector<8x8xf32>, vector<8x8xf32>, vector<8x8xf32> -> vector<8x8xf32>
    %cst_25 = arith.constant dense<0.000000e+00> : vector<8x8xf32>
    %19 = tpu.matmul %18, %1, %cst_25 {dimension_numbers = #tpu.dot_dimension_numbers<[1], [0], [0], [1], [0, 0, 1, 1], [], []>} : vector<8x8xf32>, vector<8x8xf32>, vector<8x8xf32> -> vector<8x8xf32>
    %c2_26 = arith.constant 2 : index
    %c0_27 = arith.constant 0 : index
    %c0_28 = arith.constant 0 : index
    %c0_29 = arith.constant 0 : index
    %20 = vector.load %arg4[%c2_26, %c0_27, %c0_28, %c0_29] : memref<8x1x8x8xf32, #tpu.memory_space<vmem>>, vector<1x1x8x8xf32>
    %21 = vector.shape_cast %20 : vector<1x1x8x8xf32> to vector<8x8xf32>
    %22 = vector.shape_cast %19 : vector<8x8xf32> to vector<1x1x8x8xf32>
    tpu.vector_store %arg4[%c2_26, %c0_27, %c0_28, %c0_29], %22 {strides = array<i32>} : memref<8x1x8x8xf32, #tpu.memory_space<vmem>>, vector<1x1x8x8xf32>,
    %c3 = arith.constant 3 : index
    %c0_30 = arith.constant 0 : index
    %c0_31 = arith.constant 0 : index
    %c0_32 = arith.constant 0 : index
    %23 = vector.load %arg1[%c3, %c0_30, %c0_31, %c0_32] : memref<8x1x8x8xf32, #tpu.memory_space<vmem>>, vector<1x1x8x8xf32>
    %24 = vector.shape_cast %23 : vector<1x1x8x8xf32> to vector<8x8xf32>
    %cst_33 = arith.constant dense<0.000000e+00> : vector<8x8xf32>
    %25 = tpu.matmul %0, %24, %cst_33 {dimension_numbers = #tpu.dot_dimension_numbers<[1], [1], [0], [0], [0, 0, 1, 0], [], []>} : vector<8x8xf32>, vector<8x8xf32>, vector<8x8xf32> -> vector<8x8xf32>
    %cst_34 = arith.constant dense<0.000000e+00> : vector<8x8xf32>
    %26 = tpu.matmul %25, %1, %cst_34 {dimension_numbers = #tpu.dot_dimension_numbers<[1], [0], [0], [1], [0, 0, 1, 1], [], []>} : vector<8x8xf32>, vector<8x8xf32>, vector<8x8xf32> -> vector<8x8xf32>
    %c3_35 = arith.constant 3 : index
    %c0_36 = arith.constant 0 : index
    %c0_37 = arith.constant 0 : index
    %c0_38 = arith.constant 0 : index
    %27 = vector.load %arg4[%c3_35, %c0_36, %c0_37, %c0_38] : memref<8x1x8x8xf32, #tpu.memory_space<vmem>>, vector<1x1x8x8xf32>
    %28 = vector.shape_cast %27 : vector<1x1x8x8xf32> to vector<8x8xf32>
    %29 = vector.shape_cast %26 : vector<8x8xf32> to vector<1x1x8x8xf32>
    tpu.vector_store %arg4[%c3_35, %c0_36, %c0_37, %c0_38], %29 {strides = array<i32>} : memref<8x1x8x8xf32, #tpu.memory_space<vmem>>, vector<1x1x8x8xf32>,
    %c4 = arith.constant 4 : index
    %c0_39 = arith.constant 0 : index
    %c0_40 = arith.constant 0 : index
    %c0_41 = arith.constant 0 : index
    %30 = vector.load %arg1[%c4, %c0_39, %c0_40, %c0_41] : memref<8x1x8x8xf32, #tpu.memory_space<vmem>>, vector<1x1x8x8xf32>
    %31 = vector.shape_cast %30 : vector<1x1x8x8xf32> to vector<8x8xf32>
    %cst_42 = arith.constant dense<0.000000e+00> : vector<8x8xf32>
    %32 = tpu.matmul %0, %31, %cst_42 {dimension_numbers = #tpu.dot_dimension_numbers<[1], [1], [0], [0], [0, 0, 1, 0], [], []>} : vector<8x8xf32>, vector<8x8xf32>, vector<8x8xf32> -> vector<8x8xf32>
    %cst_43 = arith.constant dense<0.000000e+00> : vector<8x8xf32>
    %33 = tpu.matmul %32, %1, %cst_43 {dimension_numbers = #tpu.dot_dimension_numbers<[1], [0], [0], [1], [0, 0, 1, 1], [], []>} : vector<8x8xf32>, vector<8x8xf32>, vector<8x8xf32> -> vector<8x8xf32>
    %c4_44 = arith.constant 4 : index
    %c0_45 = arith.constant 0 : index
    %c0_46 = arith.constant 0 : index
    %c0_47 = arith.constant 0 : index
    %34 = vector.load %arg4[%c4_44, %c0_45, %c0_46, %c0_47] : memref<8x1x8x8xf32, #tpu.memory_space<vmem>>, vector<1x1x8x8xf32>
    %35 = vector.shape_cast %34 : vector<1x1x8x8xf32> to vector<8x8xf32>
    %36 = vector.shape_cast %33 : vector<8x8xf32> to vector<1x1x8x8xf32>
    tpu.vector_store %arg4[%c4_44, %c0_45, %c0_46, %c0_47], %36 {strides = array<i32>} : memref<8x1x8x8xf32, #tpu.memory_space<vmem>>, vector<1x1x8x8xf32>,
    %c5 = arith.constant 5 : index
    %c0_48 = arith.constant 0 : index
    %c0_49 = arith.constant 0 : index
    %c0_50 = arith.constant 0 : index
    %37 = vector.load %arg1[%c5, %c0_48, %c0_49, %c0_50] : memref<8x1x8x8xf32, #tpu.memory_space<vmem>>, vector<1x1x8x8xf32>
    %38 = vector.shape_cast %37 : vector<1x1x8x8xf32> to vector<8x8xf32>
    %cst_51 = arith.constant dense<0.000000e+00> : vector<8x8xf32>
    %39 = tpu.matmul %0, %38, %cst_51 {dimension_numbers = #tpu.dot_dimension_numbers<[1], [1], [0], [0], [0, 0, 1, 0], [], []>} : vector<8x8xf32>, vector<8x8xf32>, vector<8x8xf32> -> vector<8x8xf32>
    %cst_52 = arith.constant dense<0.000000e+00> : vector<8x8xf32>
    %40 = tpu.matmul %39, %1, %cst_52 {dimension_numbers = #tpu.dot_dimension_numbers<[1], [0], [0], [1], [0, 0, 1, 1], [], []>} : vector<8x8xf32>, vector<8x8xf32>, vector<8x8xf32> -> vector<8x8xf32>
    %c5_53 = arith.constant 5 : index
    %c0_54 = arith.constant 0 : index
    %c0_55 = arith.constant 0 : index
    %c0_56 = arith.constant 0 : index
    %41 = vector.load %arg4[%c5_53, %c0_54, %c0_55, %c0_56] : memref<8x1x8x8xf32, #tpu.memory_space<vmem>>, vector<1x1x8x8xf32>
    %42 = vector.shape_cast %41 : vector<1x1x8x8xf32> to vector<8x8xf32>
    %43 = vector.shape_cast %40 : vector<8x8xf32> to vector<1x1x8x8xf32>
    tpu.vector_store %arg4[%c5_53, %c0_54, %c0_55, %c0_56], %43 {strides = array<i32>} : memref<8x1x8x8xf32, #tpu.memory_space<vmem>>, vector<1x1x8x8xf32>,
    %c6 = arith.constant 6 : index
    %c0_57 = arith.constant 0 : index
    %c0_58 = arith.constant 0 : index
    %c0_59 = arith.constant 0 : index
    %44 = vector.load %arg1[%c6, %c0_57, %c0_58, %c0_59] : memref<8x1x8x8xf32, #tpu.memory_space<vmem>>, vector<1x1x8x8xf32>
    %45 = vector.shape_cast %44 : vector<1x1x8x8xf32> to vector<8x8xf32>
    %cst_60 = arith.constant dense<0.000000e+00> : vector<8x8xf32>
    %46 = tpu.matmul %0, %45, %cst_60 {dimension_numbers = #tpu.dot_dimension_numbers<[1], [1], [0], [0], [0, 0, 1, 0], [], []>} : vector<8x8xf32>, vector<8x8xf32>, vector<8x8xf32> -> vector<8x8xf32>
    %cst_61 = arith.constant dense<0.000000e+00> : vector<8x8xf32>
    %47 = tpu.matmul %46, %1, %cst_61 {dimension_numbers = #tpu.dot_dimension_numbers<[1], [0], [0], [1], [0, 0, 1, 1], [], []>} : vector<8x8xf32>, vector<8x8xf32>, vector<8x8xf32> -> vector<8x8xf32>
    %c6_62 = arith.constant 6 : index
    %c0_63 = arith.constant 0 : index
    %c0_64 = arith.constant 0 : index
    %c0_65 = arith.constant 0 : index
    %48 = vector.load %arg4[%c6_62, %c0_63, %c0_64, %c0_65] : memref<8x1x8x8xf32, #tpu.memory_space<vmem>>, vector<1x1x8x8xf32>
    %49 = vector.shape_cast %48 : vector<1x1x8x8xf32> to vector<8x8xf32>
    %50 = vector.shape_cast %47 : vector<8x8xf32> to vector<1x1x8x8xf32>
    tpu.vector_store %arg4[%c6_62, %c0_63, %c0_64, %c0_65], %50 {strides = array<i32>} : memref<8x1x8x8xf32, #tpu.memory_space<vmem>>, vector<1x1x8x8xf32>,
    %c7 = arith.constant 7 : index
    %c0_66 = arith.constant 0 : index
    %c0_67 = arith.constant 0 : index
    %c0_68 = arith.constant 0 : index
    %51 = vector.load %arg1[%c7, %c0_66, %c0_67, %c0_68] : memref<8x1x8x8xf32, #tpu.memory_space<vmem>>, vector<1x1x8x8xf32>
    %52 = vector.shape_cast %51 : vector<1x1x8x8xf32> to vector<8x8xf32>
    %cst_69 = arith.constant dense<0.000000e+00> : vector<8x8xf32>
    %53 = tpu.matmul %0, %52, %cst_69 {dimension_numbers = #tpu.dot_dimension_numbers<[1], [1], [0], [0], [0, 0, 1, 0], [], []>} : vector<8x8xf32>, vector<8x8xf32>, vector<8x8xf32> -> vector<8x8xf32>
    %cst_70 = arith.constant dense<0.000000e+00> : vector<8x8xf32>
    %54 = tpu.matmul %53, %1, %cst_70 {dimension_numbers = #tpu.dot_dimension_numbers<[1], [0], [0], [1], [0, 0, 1, 1], [], []>} : vector<8x8xf32>, vector<8x8xf32>, vector<8x8xf32> -> vector<8x8xf32>
    %c7_71 = arith.constant 7 : index
    %c0_72 = arith.constant 0 : index
    %c0_73 = arith.constant 0 : index
    %c0_74 = arith.constant 0 : index
    %55 = vector.load %arg4[%c7_71, %c0_72, %c0_73, %c0_74] : memref<8x1x8x8xf32, #tpu.memory_space<vmem>>, vector<1x1x8x8xf32>
    %56 = vector.shape_cast %55 : vector<1x1x8x8xf32> to vector<8x8xf32>
    %57 = vector.shape_cast %54 : vector<8x8xf32> to vector<1x1x8x8xf32>
    tpu.vector_store %arg4[%c7_71, %c0_72, %c0_73, %c0_74], %57 {strides = array<i32>} : memref<8x1x8x8xf32, #tpu.memory_space<vmem>>, vector<1x1x8x8xf32>,
    return
  }
  func.func @transform_0(%arg0: i32) -> (i32, i32, i32, i32) {
    %c0_i32 = arith.constant 0 : i32
    %c0_i32_0 = arith.constant 0 : i32
    %c0_i32_1 = arith.constant 0 : i32
    %c0_i32_2 = arith.constant 0 : i32
    return %c0_i32, %arg0, %c0_i32_0, %c0_i32_1 : i32, i32, i32, i32
  }
  func.func @transform_1(%arg0: i32) -> (i32, i32) {
    %c0_i32 = arith.constant 0 : i32
    %c0_i32_0 = arith.constant 0 : i32
    %c0_i32_1 = arith.constant 0 : i32
    return %c0_i32, %c0_i32_0 : i32, i32
  }
  func.func @transform_2(%arg0: i32) -> (i32, i32) {
    %c0_i32 = arith.constant 0 : i32
    %c0_i32_0 = arith.constant 0 : i32
    %c0_i32_1 = arith.constant 0 : i32
    return %c0_i32, %c0_i32_0 : i32, i32
  }
  func.func @transform_3(%arg0: i32) -> (i32, i32, i32, i32) {
    %c0_i32 = arith.constant 0 : i32
    %c0_i32_0 = arith.constant 0 : i32
    %c0_i32_1 = arith.constant 0 : i32
    %c0_i32_2 = arith.constant 0 : i32
    return %c0_i32, %arg0, %c0_i32_0, %c0_i32_1 : i32, i32, i32, i32
  }
}

</mosaic_0001>

<llo_original>
// kernel: fn.1
$region0: #{fn.1}
  #allocation0 [shape = 'u32[]', space=smem, size = 0x4, offset = 0x4, fixed_abs, tag = 'smem constant byte address 0x4 - core index']
  #allocation1 [shape = 'u32[144,128]{1,0:T(1,128)}', space=vmem, size = 0x12000, scoped, tag = 'internal scratch']
  #allocation2 [shape = 'f32[8,8]{1,0:T(8,128)}', space=vmem, size = 0x1000, scoped, tag = 'scratch operand']
  %s0 = inlined_call_operand.hbm [shape: f32[8,8,8,8], index: 0, kind: input, shape index: {}]
  %s1 = inlined_call_operand.hbm [shape: f32[8,8], index: 1, kind: input, shape index: {}]
  %s2 = inlined_call_operand.hbm [shape: f32[8,8], index: 2, kind: input, shape index: {}]
  %s3 = inlined_call_operand.hbm [shape: f32[8,8,8,8], index: 3, kind: output, shape index: {}]
  %s4 = sld [smem:[#allocation0]]
  $region57: #{fn.1} parent=0
    _
  %s6 = ssub.s32 1, %s4
  %s7 = scalar_select 0, %s6, %s4
  $region1: #{fn.1} parent=0
    #allocation3 [shape = 'u8[65536]{0}', space=vmem, size = 0x10000, scoped, tag = 'input window, operand 0']
    #allocation4 [shape = 's32[2]{0}', space=sflag, size = 0x8, scoped, tag = 'scoped memory for fn.1']
    #allocation5 [shape = 's32[2]{0}', space=sflag, size = 0x8, scoped, tag = 'scoped memory for fn.1']
    #allocation6 [shape = 'u8[4096]{0}', space=vmem, size = 0x1000, scoped, tag = 'input window, operand 1, single buffered']
    #allocation7 [shape = 's32[1]{0}', space=sflag, size = 0x4, scoped, tag = 'scoped memory for fn.1']
    #allocation8 [shape = 'u8[4096]{0}', space=vmem, size = 0x1000, scoped, tag = 'input window, operand 2, single buffered']
    #allocation9 [shape = 'u8[65536]{0}', space=vmem, size = 0x10000, scoped, tag = 'output window, operand 0']
    %8 = vsyncpa [#allocation4], 0
    %s9 = scalar_lea.sflag [#allocation4], 1
    %10 = vsyncpa %s9, 0
    %11 = vsyncpa [#allocation7], 0
    %12 = vsyncpa [#allocation5], 0
    %s13 = scalar_lea.sflag [#allocation5], 1
    %14 = vsyncpa %s13, 0
    loop: start=0, step=1, limit=10
    $region2: #{fn.1} parent=1 // loop_pre_header
      _
    $region3: #{fn.1} parent=1 // loop_header
      %s16 = sphi 0, %s20
      %p17 = scmp.ge.s32.totalorder %s16, 10
      %s26 = sphi 0, %s28
      %s29 = sphi 0, %s26
      %s30 = sphi 0, %s29
      %s46 = sphi 0, %s30
      %s50 = sphi 0, %s50
      %s52 = sphi 0, %s50
      %s53 = sphi 0, %s52
      %s67 = sphi 0, %s53
      %s71 = sphi 0, %s71
      %s73 = sphi 0, %s71
      %s74 = sphi 0, %s73
      %s88 = sphi 0, %s74
      %s94 = sphi 0, %s96
      %s97 = sphi 0, %s94
      %s98 = sphi 0, %s97
      %s114 = sphi 0, %s98
    $region4: #{fn.1} parent=1 // loop_header_branch
      %19 = sbr.rel (%p17) target = $region8
    $region5: #{fn.1} parent=1 // loop_body
      %s21 = ssub.s32 %s16, 1
      %s22 = ssub.s32 %s16, 2
      %s23 = sadd.s32 %s16, 1
      %s24 = ssub.s32 %s16, %s23
      %p25 = scmp.eq.s32.totalorder %s24, 0
      %s27 = sadd.s32 %s26, 1
      %s28 = scalar_select %p25, %s26, %s27
      %p31 = pneg %p25
      %p32 = scmp.eq.s32.totalorder %s16, 7
      %p33 = por %p31, %p32
      %p34 = scmp.ne.s32.totalorder %s26, %s29
      %p35 = scmp.eq.s32.totalorder %s16, 0
      %p36 = por %p34, %p35
      %p37 = scmp.ne.s32.totalorder %s26, %s29
      %p38 = scmp.eq.s32.totalorder %s21, 7
      %p39 = por %p37, %p38
      %p40 = scmp.ne.s32.totalorder %s29, %s30
      %p41 = scmp.eq.s32.totalorder %s21, 0
      %p42 = por %p40, %p41
      %p43 = scmp.ne.s32.totalorder %s29, %s30
      %p44 = scmp.eq.s32.totalorder %s22, 7
      %p45 = por %p43, %p44
      %p47 = scmp.ne.s32.totalorder %s30, %s46
      %p48 = scmp.eq.s32.totalorder %s22, 0
      %p49 = por %p47, %p48
      %s51 = sadd.s32 %s50, 1
      %p54 = scmp.eq.s32.totalorder %s16, 7
      %p55 = scmp.ne.s32.totalorder %s50, %s52
      %p56 = scmp.eq.s32.totalorder %s16, 0
      %p57 = por %p55, %p56
      %p58 = scmp.ne.s32.totalorder %s50, %s52
      %p59 = scmp.eq.s32.totalorder %s21, 7
      %p60 = por %p58, %p59
      %p61 = scmp.ne.s32.totalorder %s52, %s53
      %p62 = scmp.eq.s32.totalorder %s21, 0
      %p63 = por %p61, %p62
      %p64 = scmp.ne.s32.totalorder %s52, %s53
      %p65 = scmp.eq.s32.totalorder %s22, 7
      %p66 = por %p64, %p65
      %p68 = scmp.ne.s32.totalorder %s53, %s67
      %p69 = scmp.eq.s32.totalorder %s22, 0
      %p70 = por %p68, %p69
      %s72 = sadd.s32 %s71, 1
      %p75 = scmp.eq.s32.totalorder %s16, 7
      %p76 = scmp.ne.s32.totalorder %s71, %s73
      %p77 = scmp.eq.s32.totalorder %s16, 0
      %p78 = por %p76, %p77
      %p79 = scmp.ne.s32.totalorder %s71, %s73
      %p80 = scmp.eq.s32.totalorder %s21, 7
      %p81 = por %p79, %p80
      %p82 = scmp.ne.s32.totalorder %s73, %s74
      %p83 = scmp.eq.s32.totalorder %s21, 0
      %p84 = por %p82, %p83
      %p85 = scmp.ne.s32.totalorder %s73, %s74
      %p86 = scmp.eq.s32.totalorder %s22, 7
      %p87 = por %p85, %p86
      %p89 = scmp.ne.s32.totalorder %s74, %s88
      %p90 = scmp.eq.s32.totalorder %s22, 0
      %p91 = por %p89, %p90
      %s92 = ssub.s32 %s16, %s23
      %p93 = scmp.eq.s32.totalorder %s92, 0
      %s95 = sadd.s32 %s94, 1
      %s96 = scalar_select %p93, %s94, %s95
      %p99 = pneg %p93
      %p100 = scmp.eq.s32.totalorder %s16, 7
      %p101 = por %p99, %p100
      %p102 = scmp.ne.s32.totalorder %s94, %s97
      %p103 = scmp.eq.s32.totalorder %s16, 0
      %p104 = por %p102, %p103
      %p105 = scmp.ne.s32.totalorder %s94, %s97
      %p106 = scmp.eq.s32.totalorder %s21, 7
      %p107 = por %p105, %p106
      %p108 = scmp.ne.s32.totalorder %s97, %s98
      %p109 = scmp.eq.s32.totalorder %s21, 0
      %p110 = por %p108, %p109
      %p111 = scmp.ne.s32.totalorder %s97, %s98
      %p112 = scmp.eq.s32.totalorder %s22, 7
      %p113 = por %p111, %p112
      %p115 = scmp.ne.s32.totalorder %s98, %s114
      %p116 = scmp.eq.s32.totalorder %s22, 0
      %p117 = por %p115, %p116
      %p118 = scmp.le.s32.totalorder 1, %s16
      %p119 = scmp.lt.s32.totalorder %s16, 9
      %p120 = pnand %p118, %p119
      %p121 = pneg %p120
      // Predicated region
      $region9: #{fn.1} parent=5 // pred_check
        _
      $region10: #{fn.1} parent=5 // pred_check_branch
        %123 = sbr.rel (%p120) target = $region12
      $region11: #{fn.1} parent=5 // pred_region
        %s124 = ssub.s32 %s16, 1
        // Predicated region
        $region13: #{fn.1} parent=11 // pred_check
          %p125 = pneg %p63
        $region14: #{fn.1} parent=11 // pred_check_branch
          %127 = sbr.rel (%p125) target = $region16
        $region15: #{fn.1} parent=11 // pred_region
          %s129 = ssub.s32 128, 128
          %130 = vsyncadd [#allocation7], %s129
          %s132 = sshll.u32 [#allocation6], 4
          %s133 = int_to_ptr.vmem [resolvable:$true] %s132
          %135 = dma.hbm_to_vmem [thread:$0]  %s1, 128, %s133, [#allocation7]
        $region16: #{fn.1} parent=11 // pred_fallthru
          _
        // Predicated region
        $region17: #{fn.1} parent=11 // pred_check
          %p136 = pneg %p84
        $region18: #{fn.1} parent=11 // pred_check_branch
          %138 = sbr.rel (%p136) target = $region20
        $region19: #{fn.1} parent=11 // pred_region
          %s140 = ssub.s32 128, 128
          %141 = vsyncadd [#allocation7], %s140
          %s143 = sshll.u32 [#allocation8], 4
          %s144 = int_to_ptr.vmem [resolvable:$true] %s143
          %146 = dma.hbm_to_vmem [thread:$0]  %s2, 128, %s144, [#allocation7]
        $region20: #{fn.1} parent=11 // pred_fallthru
          _
      $region12: #{fn.1} parent=5 // pred_fallthru
        _
      %p147 = scmp.lt.s32.totalorder %s16, 8
      // Predicated region
      $region21: #{fn.1} parent=5 // pred_check
        %p148 = pneg %p147
      $region22: #{fn.1} parent=5 // pred_check_branch
        %150 = sbr.rel (%p148) target = $region24
      $region23: #{fn.1} parent=5 // pred_region
        // Predicated region
        $region25: #{fn.1} parent=23 // pred_check
          %p151 = pneg %p36
        $region26: #{fn.1} parent=23 // pred_check_branch
          %153 = sbr.rel (%p151) target = $region28
        $region27: #{fn.1} parent=23 // pred_region
          %s154 = sand.u32 %s26, 1
          %s155 = scalar_lea.sflag [#allocation4], %s154
          %s156 = sand.u32 %s26, 1
          %s157 = smul.addr %s156, 64
          %s158 = scalar_lea.vmem [#allocation3], %s157
          %s160 = ssub.s32 1024, 1024
          %161 = vsyncadd %s155, %s160
          %s162 = smul.addr %s16, 128
          %s163 = scalar_lea.hbm %s0, %s162
          %s164 = sshll.u32 %s158, 4
          %s165 = int_to_ptr.vmem [resolvable:$true] %s164
          %170 = dma.hbm_to_vmem [thread:$0]  %s163, 1024, %s165, %s155, 1024, 128, 8
        $region28: #{fn.1} parent=23 // pred_fallthru
          _
      $region24: #{fn.1} parent=5 // pred_fallthru
        _
      %p171 = scmp.le.s32.totalorder 1, %s16
      %p172 = scmp.lt.s32.totalorder %s16, 9
      %p173 = pnand %p171, %p172
      %p174 = pneg %p173
      // Predicated region
      $region29: #{fn.1} parent=5 // pred_check
        _
      $region30: #{fn.1} parent=5 // pred_check_branch
        %176 = sbr.rel (%p173) target = $region32
      $region31: #{fn.1} parent=5 // pred_region
        %s177 = ssub.s32 %s16, 1
        %s178 = sand.u32 %s29, 1
        %s179 = scalar_lea.sflag [#allocation4], %s178
        %s180 = sand.u32 %s29, 1
        %s181 = smul.addr %s180, 64
        %s182 = scalar_lea.vmem [#allocation3], %s181
        // Predicated region
        $region33: #{fn.1} parent=31 // pred_check
          %p183 = pneg %p42
        $region34: #{fn.1} parent=31 // pred_check_branch
          %185 = sbr.rel (%p183) target = $region36
        $region35: #{fn.1} parent=31 // pred_region
          %186 = dma.done %s179, 1024
        $region36: #{fn.1} parent=31 // pred_fallthru
          _
        // Predicated region
        $region37: #{fn.1} parent=31 // pred_check
          %p187 = pneg %p63
        $region38: #{fn.1} parent=31 // pred_check_branch
          %189 = sbr.rel (%p187) target = $region40
        $region39: #{fn.1} parent=31 // pred_region
          %190 = dma.done [#allocation7], 128
        $region40: #{fn.1} parent=31 // pred_fallthru
          _
        // Predicated region
        $region41: #{fn.1} parent=31 // pred_check
          %p191 = pneg %p84
        $region42: #{fn.1} parent=31 // pred_check_branch
          %193 = sbr.rel (%p191) target = $region44
        $region43: #{fn.1} parent=31 // pred_region
          %194 = dma.done [#allocation7], 128
        $region44: #{fn.1} parent=31 // pred_fallthru
          _
        %s195 = sand.u32 %s29, 1
        %s196 = scalar_lea.sflag [#allocation4], %s195
        %s197 = sand.u32 %s29, 1
        %s198 = smul.addr %s197, 64
        %s199 = scalar_lea.vmem [#allocation3], %s198
        %p200 = pneg %p42
        %p201 = pneg %p39
        %p202 = pneg %p63
        %p203 = pneg %p60
        %p204 = pneg %p84
        %p205 = pneg %p81
        %p206 = pneg %p110
        %p207 = pneg %p107
        %s208 = sand.u32 %s97, 1
        %s209 = scalar_lea.sflag [#allocation5], %s208
        %s210 = sand.u32 %s97, 1
        %s211 = smul.addr %s210, 64
        %s212 = scalar_lea.vmem [#allocation9], %s211
        %v213 = vld [vmem:[#allocation6] sm:$0xff]
        %v214 = vld [vmem:[#allocation8] sm:$0xff]
        %v215 = vld [vmem:[%s182] sm:$0xff]
        %vm216 = vcmask 64512
        %v218 = vsel %vm216, %v213, 0
        %v221 = vsel %vm216, %v215, 0
        %223 = vmatprep.subr.mxu0 0.0
        %224 = vmatpush1.xpose.msra.mxu0 %v221
        %225 = vmatprep.subr.mxu0 0.0
        %226 = vmatpush1.xpose.msra.mxu0 0.0
        %227 = vmatprep.subr.mxu0 0.0
        %228 = vmatpush1.xpose.msra.mxu0 0.0
        %229 = vmatprep.subr.mxu0 0.0
        %230 = vmatpush1.xpose.msra.mxu0 0.0
        %231 = vmatprep.subr.mxu0 0.0
        %232 = vmatpush1.xpose.msra.mxu0 0.0
        %233 = vmatprep.subr.mxu0 0.0
        %234 = vmatpush1.xpose.msra.mxu0 0.0
        %235 = vmatprep.subr.mxu0 0.0
        %236 = vmatpush1.xpose.msra.mxu0 0.0
        %237 = vmatprep.subr.mxu0 0.0
        %238 = vmatpush1.xpose.msra.mxu0 0.0
        %239 = vmatprep.subr.mxu0 0.0
        %240 = vmatpush1.xpose.msra.mxu0 0.0
        %241 = vmatprep.subr.mxu0 0.0
        %242 = vmatpush1.xpose.msra.mxu0 0.0
        %243 = vmatprep.subr.mxu0 0.0
        %244 = vmatpush1.xpose.msra.mxu0 0.0
        %245 = vmatprep.subr.mxu0 0.0
        %246 = vmatpush1.xpose.msra.mxu0 0.0
        %247 = vmatprep.subr.mxu0 0.0
        %248 = vmatpush1.xpose.msra.mxu0 0.0
        %249 = vmatprep.subr.mxu0 0.0
        %250 = vmatpush1.xpose.msra.mxu0 0.0
        %251 = vmatprep.subr.mxu0 0.0
        %252 = vmatpush1.xpose.msra.mxu0 0.0
        %253 = vmatprep.subr.mxu0 0.0
        %254 = vmatpush1.xpose.msra.mxu0 0.0
        %255 = vmatprep.subr.mxu0 0.0
        %256 = vmatpush1.xpose.msra.mxu0 0.0
        %257 = vmatprep.subr.mxu0 0.0
        %258 = vmatpush1.xpose.msra.mxu0 0.0
        %259 = vmatprep.subr.mxu0 0.0
        %260 = vmatpush1.xpose.msra.mxu0 0.0
        %261 = vmatprep.subr.mxu0 0.0
        %262 = vmatpush1.xpose.msra.mxu0 0.0
        %263 = vmatprep.subr.mxu0 0.0
        %264 = vmatpush1.xpose.msra.mxu0 0.0
        %265 = vmatprep.subr.mxu0 0.0
        %266 = vmatpush1.xpose.msra.mxu0 0.0
        %267 = vmatprep.subr.mxu0 0.0
        %268 = vmatpush1.xpose.msra.mxu0 0.0
        %269 = vmatprep.subr.mxu0 0.0
        %270 = vmatpush1.xpose.msra.mxu0 0.0
        %271 = vmatprep.subr.mxu0 0.0
        %272 = vmatpush1.xpose.msra.mxu0 0.0
        %273 = vmatprep.subr.mxu0 0.0
        %274 = vmatpush1.xpose.msra.mxu0 0.0
        %275 = vmatprep.subr.mxu0 0.0
        %276 = vmatpush1.xpose.msra.mxu0 0.0
        %277 = vmatprep.subr.mxu0 0.0
        %278 = vmatpush1.xpose.msra.mxu0 0.0
        %279 = vmatprep.subr.mxu0 0.0
        %280 = vmatpush1.xpose.msra.mxu0 0.0
        %281 = vmatprep.subr.mxu0 0.0
        %282 = vmatpush1.xpose.msra.mxu0 0.0
        %283 = vmatprep.subr.mxu0 0.0
        %284 = vmatpush1.xpose.msra.mxu0 0.0
        %285 = vmatprep.subr.mxu0 0.0
        %286 = vmatpush1.xpose.msra.mxu0 0.0
        %287 = vmatprep.mubr.f32.mxu0 0.0
        %288 = vmatmul.mubr.f32.gmra.mrb[0].mxu0 %v218
        %v289 = vpop.f32.mrb[0].mxu0
        %v290 = vadd.f32 0.0, %v289
        %v291 = vpop.f32.mrb[0].mxu0
        %292 = vdwg.mxu0
        %v294 = vsel %vm216, %v290, 0
        %296 = vmatprep.subr.mxu0 0.0
        %297 = vmatpush1.msra.mxu0 %v214
        %298 = vmatprep.subr.mxu0 0.0
        %299 = vmatpush1.msra.mxu0 0.0
        %300 = vmatprep.subr.mxu0 0.0
        %301 = vmatpush1.msra.mxu0 0.0
        %302 = vmatprep.subr.mxu0 0.0
        %303 = vmatpush1.msra.mxu0 0.0
        %304 = vmatprep.subr.mxu0 0.0
        %305 = vmatpush1.msra.mxu0 0.0
        %306 = vmatprep.subr.mxu0 0.0
        %307 = vmatpush1.msra.mxu0 0.0
        %308 = vmatprep.subr.mxu0 0.0
        %309 = vmatpush1.msra.mxu0 0.0
        %310 = vmatprep.subr.mxu0 0.0
        %311 = vmatpush1.msra.mxu0 0.0
        %312 = vmatprep.subr.mxu0 0.0
        %313 = vmatpush1.msra.mxu0 0.0
        %314 = vmatprep.subr.mxu0 0.0
        %315 = vmatpush1.msra.mxu0 0.0
        %316 = vmatprep.subr.mxu0 0.0
        %317 = vmatpush1.msra.mxu0 0.0
        %318 = vmatprep.subr.mxu0 0.0
        %319 = vmatpush1.msra.mxu0 0.0
        %320 = vmatprep.subr.mxu0 0.0
        %321 = vmatpush1.msra.mxu0 0.0
        %322 = vmatprep.subr.mxu0 0.0
        %323 = vmatpush1.msra.mxu0 0.0
        %324 = vmatprep.subr.mxu0 0.0
        %325 = vmatpush1.msra.mxu0 0.0
        %326 = vmatprep.subr.mxu0 0.0
        %327 = vmatpush1.msra.mxu0 0.0
        %328 = vmatprep.subr.mxu0 0.0
        %329 = vmatpush1.msra.mxu0 0.0
        %330 = vmatprep.subr.mxu0 0.0
        %331 = vmatpush1.msra.mxu0 0.0
        %332 = vmatprep.subr.mxu0 0.0
        %333 = vmatpush1.msra.mxu0 0.0
        %334 = vmatprep.subr.mxu0 0.0
        %335 = vmatpush1.msra.mxu0 0.0
        %336 = vmatprep.subr.mxu0 0.0
        %337 = vmatpush1.msra.mxu0 0.0
        %338 = vmatprep.subr.mxu0 0.0
        %339 = vmatpush1.msra.mxu0 0.0
        %340 = vmatprep.subr.mxu0 0.0
        %341 = vmatpush1.msra.mxu0 0.0
        %342 = vmatprep.subr.mxu0 0.0
        %343 = vmatpush1.msra.mxu0 0.0
        %344 = vmatprep.subr.mxu0 0.0
        %345 = vmatpush1.msra.mxu0 0.0
        %346 = vmatprep.subr.mxu0 0.0
        %347 = vmatpush1.msra.mxu0 0.0
        %348 = vmatprep.subr.mxu0 0.0
        %349 = vmatpush1.msra.mxu0 0.0
        %350 = vmatprep.subr.mxu0 0.0
        %351 = vmatpush1.msra.mxu0 0.0
        %352 = vmatprep.subr.mxu0 0.0
        %353 = vmatpush1.msra.mxu0 0.0
        %354 = vmatprep.subr.mxu0 0.0
        %355 = vmatpush1.msra.mxu0 0.0
        %356 = vmatprep.subr.mxu0 0.0
        %357 = vmatpush1.msra.mxu0 0.0
        %358 = vmatprep.subr.mxu0 0.0
        %359 = vmatpush1.msra.mxu0 0.0
        %360 = vmatprep.mubr.f32.mxu0 0.0
        %361 = vmatmul.mubr.f32.gmra.mrb[0].mxu0 %v294
        %v362 = vpop.f32.mrb[0].mxu0
        %v363 = vadd.f32 0.0, %v362
        %v364 = vpop.f32.mrb[0].mxu0
        %365 = vdwg.mxu0
        %366 = vst.msk [vmem:[%s212] sm:$0xff] %vm216, %v363
        %s367 = scalar_lea.vmem %s182, 8 [#allocation3]
        %v368 = vld [vmem:[%s367] sm:$0xff]
        %v370 = vsel %vm216, %v368, 0
        %372 = vmatprep.subr.mxu0 0.0
        %373 = vmatpush1.xpose.msra.mxu0 %v370
        %374 = vmatprep.subr.mxu0 0.0
        %375 = vmatpush1.xpose.msra.mxu0 0.0
        %376 = vmatprep.subr.mxu0 0.0
        %377 = vmatpush1.xpose.msra.mxu0 0.0
        %378 = vmatprep.subr.mxu0 0.0
        %379 = vmatpush1.xpose.msra.mxu0 0.0
        %380 = vmatprep.subr.mxu0 0.0
        %381 = vmatpush1.xpose.msra.mxu0 0.0
        %382 = vmatprep.subr.mxu0 0.0
        %383 = vmatpush1.xpose.msra.mxu0 0.0
        %384 = vmatprep.subr.mxu0 0.0
        %385 = vmatpush1.xpose.msra.mxu0 0.0
        %386 = vmatprep.subr.mxu0 0.0
        %387 = vmatpush1.xpose.msra.mxu0 0.0
        %388 = vmatprep.subr.mxu0 0.0
        %389 = vmatpush1.xpose.msra.mxu0 0.0
        %390 = vmatprep.subr.mxu0 0.0
        %391 = vmatpush1.xpose.msra.mxu0 0.0
        %392 = vmatprep.subr.mxu0 0.0
        %393 = vmatpush1.xpose.msra.mxu0 0.0
        %394 = vmatprep.subr.mxu0 0.0
        %395 = vmatpush1.xpose.msra.mxu0 0.0
        %396 = vmatprep.subr.mxu0 0.0
        %397 = vmatpush1.xpose.msra.mxu0 0.0
        %398 = vmatprep.subr.mxu0 0.0
        %399 = vmatpush1.xpose.msra.mxu0 0.0
        %400 = vmatprep.subr.mxu0 0.0
        %401 = vmatpush1.xpose.msra.mxu0 0.0
        %402 = vmatprep.subr.mxu0 0.0
        %403 = vmatpush1.xpose.msra.mxu0 0.0
        %404 = vmatprep.subr.mxu0 0.0
        %405 = vmatpush1.xpose.msra.mxu0 0.0
        %406 = vmatprep.subr.mxu0 0.0
        %407 = vmatpush1.xpose.msra.mxu0 0.0
        %408 = vmatprep.subr.mxu0 0.0
        %409 = vmatpush1.xpose.msra.mxu0 0.0
        %410 = vmatprep.subr.mxu0 0.0
        %411 = vmatpush1.xpose.msra.mxu0 0.0
        %412 = vmatprep.subr.mxu0 0.0
        %413 = vmatpush1.xpose.msra.mxu0 0.0
        %414 = vmatprep.subr.mxu0 0.0
        %415 = vmatpush1.xpose.msra.mxu0 0.0
        %416 = vmatprep.subr.mxu0 0.0
        %417 = vmatpush1.xpose.msra.mxu0 0.0
        %418 = vmatprep.subr.mxu0 0.0
        %419 = vmatpush1.xpose.msra.mxu0 0.0
        %420 = vmatprep.subr.mxu0 0.0
        %421 = vmatpush1.xpose.msra.mxu0 0.0
        %422 = vmatprep.subr.mxu0 0.0
        %423 = vmatpush1.xpose.msra.mxu0 0.0
        %424 = vmatprep.subr.mxu0 0.0
        %425 = vmatpush1.xpose.msra.mxu0 0.0
        %426 = vmatprep.subr.mxu0 0.0
        %427 = vmatpush1.xpose.msra.mxu0 0.0
        %428 = vmatprep.subr.mxu0 0.0
        %429 = vmatpush1.xpose.msra.mxu0 0.0
        %430 = vmatprep.subr.mxu0 0.0
        %431 = vmatpush1.xpose.msra.mxu0 0.0
        %432 = vmatprep.subr.mxu0 0.0
        %433 = vmatpush1.xpose.msra.mxu0 0.0
        %434 = vmatprep.subr.mxu0 0.0
        %435 = vmatpush1.xpose.msra.mxu0 0.0
        %436 = vmatprep.mubr.f32.mxu0 0.0
        %437 = vmatmul.mubr.f32.gmra.mrb[0].mxu0 %v218
        %v438 = vpop.f32.mrb[0].mxu0
        %v439 = vadd.f32 0.0, %v438
        %v440 = vpop.f32.mrb[0].mxu0
        %441 = vdwg.mxu0
        %v443 = vsel %vm216, %v439, 0
        %445 = vmatprep.subr.mxu0 0.0
        %446 = vmatpush1.msra.mxu0 %v214
        %447 = vmatprep.subr.mxu0 0.0
        %448 = vmatpush1.msra.mxu0 0.0
        %449 = vmatprep.subr.mxu0 0.0
        %450 = vmatpush1.msra.mxu0 0.0
        %451 = vmatprep.subr.mxu0 0.0
        %452 = vmatpush1.msra.mxu0 0.0
        %453 = vmatprep.subr.mxu0 0.0
        %454 = vmatpush1.msra.mxu0 0.0
        %455 = vmatprep.subr.mxu0 0.0
        %456 = vmatpush1.msra.mxu0 0.0
        %457 = vmatprep.subr.mxu0 0.0
        %458 = vmatpush1.msra.mxu0 0.0
        %459 = vmatprep.subr.mxu0 0.0
        %460 = vmatpush1.msra.mxu0 0.0
        %461 = vmatprep.subr.mxu0 0.0
        %462 = vmatpush1.msra.mxu0 0.0
        %463 = vmatprep.subr.mxu0 0.0
        %464 = vmatpush1.msra.mxu0 0.0
        %465 = vmatprep.subr.mxu0 0.0
        %466 = vmatpush1.msra.mxu0 0.0
        %467 = vmatprep.subr.mxu0 0.0
        %468 = vmatpush1.msra.mxu0 0.0
        %469 = vmatprep.subr.mxu0 0.0
        %470 = vmatpush1.msra.mxu0 0.0
        %471 = vmatprep.subr.mxu0 0.0
        %472 = vmatpush1.msra.mxu0 0.0
        %473 = vmatprep.subr.mxu0 0.0
        %474 = vmatpush1.msra.mxu0 0.0
        %475 = vmatprep.subr.mxu0 0.0
        %476 = vmatpush1.msra.mxu0 0.0
        %477 = vmatprep.subr.mxu0 0.0
        %478 = vmatpush1.msra.mxu0 0.0
        %479 = vmatprep.subr.mxu0 0.0
        %480 = vmatpush1.msra.mxu0 0.0
        %481 = vmatprep.subr.mxu0 0.0
        %482 = vmatpush1.msra.mxu0 0.0
        %483 = vmatprep.subr.mxu0 0.0
        %484 = vmatpush1.msra.mxu0 0.0
        %485 = vmatprep.subr.mxu0 0.0
        %486 = vmatpush1.msra.mxu0 0.0
        %487 = vmatprep.subr.mxu0 0.0
        %488 = vmatpush1.msra.mxu0 0.0
        %489 = vmatprep.subr.mxu0 0.0
        %490 = vmatpush1.msra.mxu0 0.0
        %491 = vmatprep.subr.mxu0 0.0
        %492 = vmatpush1.msra.mxu0 0.0
        %493 = vmatprep.subr.mxu0 0.0
        %494 = vmatpush1.msra.mxu0 0.0
        %495 = vmatprep.subr.mxu0 0.0
        %496 = vmatpush1.msra.mxu0 0.0
        %497 = vmatprep.subr.mxu0 0.0
        %498 = vmatpush1.msra.mxu0 0.0
        %499 = vmatprep.subr.mxu0 0.0
        %500 = vmatpush1.msra.mxu0 0.0
        %501 = vmatprep.subr.mxu0 0.0
        %502 = vmatpush1.msra.mxu0 0.0
        %503 = vmatprep.subr.mxu0 0.0
        %504 = vmatpush1.msra.mxu0 0.0
        %505 = vmatprep.subr.mxu0 0.0
        %506 = vmatpush1.msra.mxu0 0.0
        %507 = vmatprep.subr.mxu0 0.0
        %508 = vmatpush1.msra.mxu0 0.0
        %509 = vmatprep.mubr.f32.mxu0 0.0
        %510 = vmatmul.mubr.f32.gmra.mrb[0].mxu0 %v443
        %v511 = vpop.f32.mrb[0].mxu0
        %v512 = vadd.f32 0.0, %v511
        %v513 = vpop.f32.mrb[0].mxu0
        %514 = vdwg.mxu0
        %s515 = scalar_lea.vmem %s212, 8 [#allocation9]
        %516 = vst.msk [vmem:[%s515] sm:$0xff] %vm216, %v512
        %s517 = scalar_lea.vmem %s182, 16 [#allocation3]
        %v518 = vld [vmem:[%s517] sm:$0xff]
        %v520 = vsel %vm216, %v518, 0
        %522 = vmatprep.subr.mxu0 0.0
        %523 = vmatpush1.xpose.msra.mxu0 %v520
        %524 = vmatprep.subr.mxu0 0.0
        %525 = vmatpush1.xpose.msra.mxu0 0.0
        %526 = vmatprep.subr.mxu0 0.0
        %527 = vmatpush1.xpose.msra.mxu0 0.0
        %528 = vmatprep.subr.mxu0 0.0
        %529 = vmatpush1.xpose.msra.mxu0 0.0
        %530 = vmatprep.subr.mxu0 0.0
        %531 = vmatpush1.xpose.msra.mxu0 0.0
        %532 = vmatprep.subr.mxu0 0.0
        %533 = vmatpush1.xpose.msra.mxu0 0.0
        %534 = vmatprep.subr.mxu0 0.0
        %535 = vmatpush1.xpose.msra.mxu0 0.0
        %536 = vmatprep.subr.mxu0 0.0
        %537 = vmatpush1.xpose.msra.mxu0 0.0
        %538 = vmatprep.subr.mxu0 0.0
        %539 = vmatpush1.xpose.msra.mxu0 0.0
        %540 = vmatprep.subr.mxu0 0.0
        %541 = vmatpush1.xpose.msra.mxu0 0.0
        %542 = vmatprep.subr.mxu0 0.0
        %543 = vmatpush1.xpose.msra.mxu0 0.0
        %544 = vmatprep.subr.mxu0 0.0
        %545 = vmatpush1.xpose.msra.mxu0 0.0
        %546 = vmatprep.subr.mxu0 0.0
        %547 = vmatpush1.xpose.msra.mxu0 0.0
        %548 = vmatprep.subr.mxu0 0.0
        %549 = vmatpush1.xpose.msra.mxu0 0.0
        %550 = vmatprep.subr.mxu0 0.0
        %551 = vmatpush1.xpose.msra.mxu0 0.0
        %552 = vmatprep.subr.mxu0 0.0
        %553 = vmatpush1.xpose.msra.mxu0 0.0
        %554 = vmatprep.subr.mxu0 0.0
        %555 = vmatpush1.xpose.msra.mxu0 0.0
        %556 = vmatprep.subr.mxu0 0.0
        %557 = vmatpush1.xpose.msra.mxu0 0.0
        %558 = vmatprep.subr.mxu0 0.0
        %559 = vmatpush1.xpose.msra.mxu0 0.0
        %560 = vmatprep.subr.mxu0 0.0
        %561 = vmatpush1.xpose.msra.mxu0 0.0
        %562 = vmatprep.subr.mxu0 0.0
        %563 = vmatpush1.xpose.msra.mxu0 0.0
        %564 = vmatprep.subr.mxu0 0.0
        %565 = vmatpush1.xpose.msra.mxu0 0.0
        %566 = vmatprep.subr.mxu0 0.0
        %567 = vmatpush1.xpose.msra.mxu0 0.0
        %568 = vmatprep.subr.mxu0 0.0
        %569 = vmatpush1.xpose.msra.mxu0 0.0
        %570 = vmatprep.subr.mxu0 0.0
        %571 = vmatpush1.xpose.msra.mxu0 0.0
        %572 = vmatprep.subr.mxu0 0.0
        %573 = vmatpush1.xpose.msra.mxu0 0.0
        %574 = vmatprep.subr.mxu0 0.0
        %575 = vmatpush1.xpose.msra.mxu0 0.0
        %576 = vmatprep.subr.mxu0 0.0
        %577 = vmatpush1.xpose.msra.mxu0 0.0
        %578 = vmatprep.subr.mxu0 0.0
        %579 = vmatpush1.xpose.msra.mxu0 0.0
        %580 = vmatprep.subr.mxu0 0.0
        %581 = vmatpush1.xpose.msra.mxu0 0.0
        %582 = vmatprep.subr.mxu0 0.0
        %583 = vmatpush1.xpose.msra.mxu0 0.0
        %584 = vmatprep.subr.mxu0 0.0
        %585 = vmatpush1.xpose.msra.mxu0 0.0
        %586 = vmatprep.mubr.f32.mxu0 0.0
        %587 = vmatmul.mubr.f32.gmra.mrb[0].mxu0 %v218
        %v588 = vpop.f32.mrb[0].mxu0
        %v589 = vadd.f32 0.0, %v588
        %v590 = vpop.f32.mrb[0].mxu0
        %591 = vdwg.mxu0
        %v593 = vsel %vm216, %v589, 0
        %595 = vmatprep.subr.mxu0 0.0
        %596 = vmatpush1.msra.mxu0 %v214
        %597 = vmatprep.subr.mxu0 0.0
        %598 = vmatpush1.msra.mxu0 0.0
        %599 = vmatprep.subr.mxu0 0.0
        %600 = vmatpush1.msra.mxu0 0.0
        %601 = vmatprep.subr.mxu0 0.0
        %602 = vmatpush1.msra.mxu0 0.0
        %603 = vmatprep.subr.mxu0 0.0
        %604 = vmatpush1.msra.mxu0 0.0
        %605 = vmatprep.subr.mxu0 0.0
        %606 = vmatpush1.msra.mxu0 0.0
        %607 = vmatprep.subr.mxu0 0.0
        %608 = vmatpush1.msra.mxu0 0.0
        %609 = vmatprep.subr.mxu0 0.0
        %610 = vmatpush1.msra.mxu0 0.0
        %611 = vmatprep.subr.mxu0 0.0
        %612 = vmatpush1.msra.mxu0 0.0
        %613 = vmatprep.subr.mxu0 0.0
        %614 = vmatpush1.msra.mxu0 0.0
        %615 = vmatprep.subr.mxu0 0.0
        %616 = vmatpush1.msra.mxu0 0.0
        %617 = vmatprep.subr.mxu0 0.0
        %618 = vmatpush1.msra.mxu0 0.0
        %619 = vmatprep.subr.mxu0 0.0
        %620 = vmatpush1.msra.mxu0 0.0
        %621 = vmatprep.subr.mxu0 0.0
        %622 = vmatpush1.msra.mxu0 0.0
        %623 = vmatprep.subr.mxu0 0.0
        %624 = vmatpush1.msra.mxu0 0.0
        %625 = vmatprep.subr.mxu0 0.0
        %626 = vmatpush1.msra.mxu0 0.0
        %627 = vmatprep.subr.mxu0 0.0
        %628 = vmatpush1.msra.mxu0 0.0
        %629 = vmatprep.subr.mxu0 0.0
        %630 = vmatpush1.msra.mxu0 0.0
        %631 = vmatprep.subr.mxu0 0.0
        %632 = vmatpush1.msra.mxu0 0.0
        %633 = vmatprep.subr.mxu0 0.0
        %634 = vmatpush1.msra.mxu0 0.0
        %635 = vmatprep.subr.mxu0 0.0
        %636 = vmatpush1.msra.mxu0 0.0
        %637 = vmatprep.subr.mxu0 0.0
        %638 = vmatpush1.msra.mxu0 0.0
        %639 = vmatprep.subr.mxu0 0.0
        %640 = vmatpush1.msra.mxu0 0.0
        %641 = vmatprep.subr.mxu0 0.0
        %642 = vmatpush1.msra.mxu0 0.0
        %643 = vmatprep.subr.mxu0 0.0
        %644 = vmatpush1.msra.mxu0 0.0
        %645 = vmatprep.subr.mxu0 0.0
        %646 = vmatpush1.msra.mxu0 0.0
        %647 = vmatprep.subr.mxu0 0.0
        %648 = vmatpush1.msra.mxu0 0.0
        %649 = vmatprep.subr.mxu0 0.0
        %650 = vmatpush1.msra.mxu0 0.0
        %651 = vmatprep.subr.mxu0 0.0
        %652 = vmatpush1.msra.mxu0 0.0
        %653 = vmatprep.subr.mxu0 0.0
        %654 = vmatpush1.msra.mxu0 0.0
        %655 = vmatprep.subr.mxu0 0.0
        %656 = vmatpush1.msra.mxu0 0.0
        %657 = vmatprep.subr.mxu0 0.0
        %658 = vmatpush1.msra.mxu0 0.0
        %659 = vmatprep.mubr.f32.mxu0 0.0
        %660 = vmatmul.mubr.f32.gmra.mrb[0].mxu0 %v593
        %v661 = vpop.f32.mrb[0].mxu0
        %v662 = vadd.f32 0.0, %v661
        %v663 = vpop.f32.mrb[0].mxu0
        %664 = vdwg.mxu0
        %s665 = scalar_lea.vmem %s212, 16 [#allocation9]
        %666 = vst.msk [vmem:[%s665] sm:$0xff] %vm216, %v662
        %s667 = scalar_lea.vmem %s182, 24 [#allocation3]
        %v668 = vld [vmem:[%s667] sm:$0xff]
        %v670 = vsel %vm216, %v668, 0
        %672 = vmatprep.subr.mxu0 0.0
        %673 = vmatpush1.xpose.msra.mxu0 %v670
        %674 = vmatprep.subr.mxu0 0.0
        %675 = vmatpush1.xpose.msra.mxu0 0.0
        %676 = vmatprep.subr.mxu0 0.0
        %677 = vmatpush1.xpose.msra.mxu0 0.0
        %678 = vmatprep.subr.mxu0 0.0
        %679 = vmatpush1.xpose.msra.mxu0 0.0
        %680 = vmatprep.subr.mxu0 0.0
        %681 = vmatpush1.xpose.msra.mxu0 0.0
        %682 = vmatprep.subr.mxu0 0.0
        %683 = vmatpush1.xpose.msra.mxu0 0.0
        %684 = vmatprep.subr.mxu0 0.0
        %685 = vmatpush1.xpose.msra.mxu0 0.0
        %686 = vmatprep.subr.mxu0 0.0
        %687 = vmatpush1.xpose.msra.mxu0 0.0
        %688 = vmatprep.subr.mxu0 0.0
        %689 = vmatpush1.xpose.msra.mxu0 0.0
        %690 = vmatprep.subr.mxu0 0.0
        %691 = vmatpush1.xpose.msra.mxu0 0.0
        %692 = vmatprep.subr.mxu0 0.0
        %693 = vmatpush1.xpose.msra.mxu0 0.0
        %694 = vmatprep.subr.mxu0 0.0
        %695 = vmatpush1.xpose.msra.mxu0 0.0
        %696 = vmatprep.subr.mxu0 0.0
        %697 = vmatpush1.xpose.msra.mxu0 0.0
        %698 = vmatprep.subr.mxu0 0.0
        %699 = vmatpush1.xpose.msra.mxu0 0.0
        %700 = vmatprep.subr.mxu0 0.0
        %701 = vmatpush1.xpose.msra.mxu0 0.0
        %702 = vmatprep.subr.mxu0 0.0
        %703 = vmatpush1.xpose.msra.mxu0 0.0
        %704 = vmatprep.subr.mxu0 0.0
        %705 = vmatpush1.xpose.msra.mxu0 0.0
        %706 = vmatprep.subr.mxu0 0.0
        %707 = vmatpush1.xpose.msra.mxu0 0.0
        %708 = vmatprep.subr.mxu0 0.0
        %709 = vmatpush1.xpose.msra.mxu0 0.0
        %710 = vmatprep.subr.mxu0 0.0
        %711 = vmatpush1.xpose.msra.mxu0 0.0
        %712 = vmatprep.subr.mxu0 0.0
        %713 = vmatpush1.xpose.msra.mxu0 0.0
        %714 = vmatprep.subr.mxu0 0.0
        %715 = vmatpush1.xpose.msra.mxu0 0.0
        %716 = vmatprep.subr.mxu0 0.0
        %717 = vmatpush1.xpose.msra.mxu0 0.0
        %718 = vmatprep.subr.mxu0 0.0
        %719 = vmatpush1.xpose.msra.mxu0 0.0
        %720 = vmatprep.subr.mxu0 0.0
        %721 = vmatpush1.xpose.msra.mxu0 0.0
        %722 = vmatprep.subr.mxu0 0.0
        %723 = vmatpush1.xpose.msra.mxu0 0.0
        %724 = vmatprep.subr.mxu0 0.0
        %725 = vmatpush1.xpose.msra.mxu0 0.0
        %726 = vmatprep.subr.mxu0 0.0
        %727 = vmatpush1.xpose.msra.mxu0 0.0
        %728 = vmatprep.subr.mxu0 0.0
        %729 = vmatpush1.xpose.msra.mxu0 0.0
        %730 = vmatprep.subr.mxu0 0.0
        %731 = vmatpush1.xpose.msra.mxu0 0.0
        %732 = vmatprep.subr.mxu0 0.0
        %733 = vmatpush1.xpose.msra.mxu0 0.0
        %734 = vmatprep.subr.mxu0 0.0
        %735 = vmatpush1.xpose.msra.mxu0 0.0
        %736 = vmatprep.mubr.f32.mxu0 0.0
        %737 = vmatmul.mubr.f32.gmra.mrb[0].mxu0 %v218
        %v738 = vpop.f32.mrb[0].mxu0
        %v739 = vadd.f32 0.0, %v738
        %v740 = vpop.f32.mrb[0].mxu0
        %741 = vdwg.mxu0
        %v743 = vsel %vm216, %v739, 0
        %745 = vmatprep.subr.mxu0 0.0
        %746 = vmatpush1.msra.mxu0 %v214
        %747 = vmatprep.subr.mxu0 0.0
        %748 = vmatpush1.msra.mxu0 0.0
        %749 = vmatprep.subr.mxu0 0.0
        %750 = vmatpush1.msra.mxu0 0.0
        %751 = vmatprep.subr.mxu0 0.0
        %752 = vmatpush1.msra.mxu0 0.0
        %753 = vmatprep.subr.mxu0 0.0
        %754 = vmatpush1.msra.mxu0 0.0
        %755 = vmatprep.subr.mxu0 0.0
        %756 = vmatpush1.msra.mxu0 0.0
        %757 = vmatprep.subr.mxu0 0.0
        %758 = vmatpush1.msra.mxu0 0.0
        %759 = vmatprep.subr.mxu0 0.0
        %760 = vmatpush1.msra.mxu0 0.0
        %761 = vmatprep.subr.mxu0 0.0
        %762 = vmatpush1.msra.mxu0 0.0
        %763 = vmatprep.subr.mxu0 0.0
        %764 = vmatpush1.msra.mxu0 0.0
        %765 = vmatprep.subr.mxu0 0.0
        %766 = vmatpush1.msra.mxu0 0.0
        %767 = vmatprep.subr.mxu0 0.0
        %768 = vmatpush1.msra.mxu0 0.0
        %769 = vmatprep.subr.mxu0 0.0
        %770 = vmatpush1.msra.mxu0 0.0
        %771 = vmatprep.subr.mxu0 0.0
        %772 = vmatpush1.msra.mxu0 0.0
        %773 = vmatprep.subr.mxu0 0.0
        %774 = vmatpush1.msra.mxu0 0.0
        %775 = vmatprep.subr.mxu0 0.0
        %776 = vmatpush1.msra.mxu0 0.0
        %777 = vmatprep.subr.mxu0 0.0
        %778 = vmatpush1.msra.mxu0 0.0
        %779 = vmatprep.subr.mxu0 0.0
        %780 = vmatpush1.msra.mxu0 0.0
        %781 = vmatprep.subr.mxu0 0.0
        %782 = vmatpush1.msra.mxu0 0.0
        %783 = vmatprep.subr.mxu0 0.0
        %784 = vmatpush1.msra.mxu0 0.0
        %785 = vmatprep.subr.mxu0 0.0
        %786 = vmatpush1.msra.mxu0 0.0
        %787 = vmatprep.subr.mxu0 0.0
        %788 = vmatpush1.msra.mxu0 0.0
        %789 = vmatprep.subr.mxu0 0.0
        %790 = vmatpush1.msra.mxu0 0.0
        %791 = vmatprep.subr.mxu0 0.0
        %792 = vmatpush1.msra.mxu0 0.0
        %793 = vmatprep.subr.mxu0 0.0
        %794 = vmatpush1.msra.mxu0 0.0
        %795 = vmatprep.subr.mxu0 0.0
        %796 = vmatpush1.msra.mxu0 0.0
        %797 = vmatprep.subr.mxu0 0.0
        %798 = vmatpush1.msra.mxu0 0.0
        %799 = vmatprep.subr.mxu0 0.0
        %800 = vmatpush1.msra.mxu0 0.0
        %801 = vmatprep.subr.mxu0 0.0
        %802 = vmatpush1.msra.mxu0 0.0
        %803 = vmatprep.subr.mxu0 0.0
        %804 = vmatpush1.msra.mxu0 0.0
        %805 = vmatprep.subr.mxu0 0.0
        %806 = vmatpush1.msra.mxu0 0.0
        %807 = vmatprep.subr.mxu0 0.0
        %808 = vmatpush1.msra.mxu0 0.0
        %809 = vmatprep.mubr.f32.mxu0 0.0
        %810 = vmatmul.mubr.f32.gmra.mrb[0].mxu0 %v743
        %v811 = vpop.f32.mrb[0].mxu0
        %v812 = vadd.f32 0.0, %v811
        %v813 = vpop.f32.mrb[0].mxu0
        %814 = vdwg.mxu0
        %s815 = scalar_lea.vmem %s212, 24 [#allocation9]
        %816 = vst.msk [vmem:[%s815] sm:$0xff] %vm216, %v812
        %s817 = scalar_lea.vmem %s182, 32 [#allocation3]
        %v818 = vld [vmem:[%s817] sm:$0xff]
        %v820 = vsel %vm216, %v818, 0
        %822 = vmatprep.subr.mxu0 0.0
        %823 = vmatpush1.xpose.msra.mxu0 %v820
        %824 = vmatprep.subr.mxu0 0.0
        %825 = vmatpush1.xpose.msra.mxu0 0.0
        %826 = vmatprep.subr.mxu0 0.0
        %827 = vmatpush1.xpose.msra.mxu0 0.0
        %828 = vmatprep.subr.mxu0 0.0
        %829 = vmatpush1.xpose.msra.mxu0 0.0
        %830 = vmatprep.subr.mxu0 0.0
        %831 = vmatpush1.xpose.msra.mxu0 0.0
        %832 = vmatprep.subr.mxu0 0.0
        %833 = vmatpush1.xpose.msra.mxu0 0.0
        %834 = vmatprep.subr.mxu0 0.0
        %835 = vmatpush1.xpose.msra.mxu0 0.0
        %836 = vmatprep.subr.mxu0 0.0
        %837 = vmatpush1.xpose.msra.mxu0 0.0
        %838 = vmatprep.subr.mxu0 0.0
        %839 = vmatpush1.xpose.msra.mxu0 0.0
        %840 = vmatprep.subr.mxu0 0.0
        %841 = vmatpush1.xpose.msra.mxu0 0.0
        %842 = vmatprep.subr.mxu0 0.0
        %843 = vmatpush1.xpose.msra.mxu0 0.0
        %844 = vmatprep.subr.mxu0 0.0
        %845 = vmatpush1.xpose.msra.mxu0 0.0
        %846 = vmatprep.subr.mxu0 0.0
        %847 = vmatpush1.xpose.msra.mxu0 0.0
        %848 = vmatprep.subr.mxu0 0.0
        %849 = vmatpush1.xpose.msra.mxu0 0.0
        %850 = vmatprep.subr.mxu0 0.0
        %851 = vmatpush1.xpose.msra.mxu0 0.0
        %852 = vmatprep.subr.mxu0 0.0
        %853 = vmatpush1.xpose.msra.mxu0 0.0
        %854 = vmatprep.subr.mxu0 0.0
        %855 = vmatpush1.xpose.msra.mxu0 0.0
        %856 = vmatprep.subr.mxu0 0.0
        %857 = vmatpush1.xpose.msra.mxu0 0.0
        %858 = vmatprep.subr.mxu0 0.0
        %859 = vmatpush1.xpose.msra.mxu0 0.0
        %860 = vmatprep.subr.mxu0 0.0
        %861 = vmatpush1.xpose.msra.mxu0 0.0
        %862 = vmatprep.subr.mxu0 0.0
        %863 = vmatpush1.xpose.msra.mxu0 0.0
        %864 = vmatprep.subr.mxu0 0.0
        %865 = vmatpush1.xpose.msra.mxu0 0.0
        %866 = vmatprep.subr.mxu0 0.0
        %867 = vmatpush1.xpose.msra.mxu0 0.0
        %868 = vmatprep.subr.mxu0 0.0
        %869 = vmatpush1.xpose.msra.mxu0 0.0
        %870 = vmatprep.subr.mxu0 0.0
        %871 = vmatpush1.xpose.msra.mxu0 0.0
        %872 = vmatprep.subr.mxu0 0.0
        %873 = vmatpush1.xpose.msra.mxu0 0.0
        %874 = vmatprep.subr.mxu0 0.0
        %875 = vmatpush1.xpose.msra.mxu0 0.0
        %876 = vmatprep.subr.mxu0 0.0
        %877 = vmatpush1.xpose.msra.mxu0 0.0
        %878 = vmatprep.subr.mxu0 0.0
        %879 = vmatpush1.xpose.msra.mxu0 0.0
        %880 = vmatprep.subr.mxu0 0.0
        %881 = vmatpush1.xpose.msra.mxu0 0.0
        %882 = vmatprep.subr.mxu0 0.0
        %883 = vmatpush1.xpose.msra.mxu0 0.0
        %884 = vmatprep.subr.mxu0 0.0
        %885 = vmatpush1.xpose.msra.mxu0 0.0
        %886 = vmatprep.mubr.f32.mxu0 0.0
        %887 = vmatmul.mubr.f32.gmra.mrb[0].mxu0 %v218
        %v888 = vpop.f32.mrb[0].mxu0
        %v889 = vadd.f32 0.0, %v888
        %v890 = vpop.f32.mrb[0].mxu0
        %891 = vdwg.mxu0
        %v893 = vsel %vm216, %v889, 0
        %895 = vmatprep.subr.mxu0 0.0
        %896 = vmatpush1.msra.mxu0 %v214
        %897 = vmatprep.subr.mxu0 0.0
        %898 = vmatpush1.msra.mxu0 0.0
        %899 = vmatprep.subr.mxu0 0.0
        %900 = vmatpush1.msra.mxu0 0.0
        %901 = vmatprep.subr.mxu0 0.0
        %902 = vmatpush1.msra.mxu0 0.0
        %903 = vmatprep.subr.mxu0 0.0
        %904 = vmatpush1.msra.mxu0 0.0
        %905 = vmatprep.subr.mxu0 0.0
        %906 = vmatpush1.msra.mxu0 0.0
        %907 = vmatprep.subr.mxu0 0.0
        %908 = vmatpush1.msra.mxu0 0.0
        %909 = vmatprep.subr.mxu0 0.0
        %910 = vmatpush1.msra.mxu0 0.0
        %911 = vmatprep.subr.mxu0 0.0
        %912 = vmatpush1.msra.mxu0 0.0
        %913 = vmatprep.subr.mxu0 0.0
        %914 = vmatpush1.msra.mxu0 0.0
        %915 = vmatprep.subr.mxu0 0.0
        %916 = vmatpush1.msra.mxu0 0.0
        %917 = vmatprep.subr.mxu0 0.0
        %918 = vmatpush1.msra.mxu0 0.0
        %919 = vmatprep.subr.mxu0 0.0
        %920 = vmatpush1.msra.mxu0 0.0
        %921 = vmatprep.subr.mxu0 0.0
        %922 = vmatpush1.msra.mxu0 0.0
        %923 = vmatprep.subr.mxu0 0.0
        %924 = vmatpush1.msra.mxu0 0.0
        %925 = vmatprep.subr.mxu0 0.0
        %926 = vmatpush1.msra.mxu0 0.0
        %927 = vmatprep.subr.mxu0 0.0
        %928 = vmatpush1.msra.mxu0 0.0
        %929 = vmatprep.subr.mxu0 0.0
        %930 = vmatpush1.msra.mxu0 0.0
        %931 = vmatprep.subr.mxu0 0.0
        %932 = vmatpush1.msra.mxu0 0.0
        %933 = vmatprep.subr.mxu0 0.0
        %934 = vmatpush1.msra.mxu0 0.0
        %935 = vmatprep.subr.mxu0 0.0
        %936 = vmatpush1.msra.mxu0 0.0
        %937 = vmatprep.subr.mxu0 0.0
        %938 = vmatpush1.msra.mxu0 0.0
        %939 = vmatprep.subr.mxu0 0.0
        %940 = vmatpush1.msra.mxu0 0.0
        %941 = vmatprep.subr.mxu0 0.0
        %942 = vmatpush1.msra.mxu0 0.0
        %943 = vmatprep.subr.mxu0 0.0
        %944 = vmatpush1.msra.mxu0 0.0
        %945 = vmatprep.subr.mxu0 0.0
        %946 = vmatpush1.msra.mxu0 0.0
        %947 = vmatprep.subr.mxu0 0.0
        %948 = vmatpush1.msra.mxu0 0.0
        %949 = vmatprep.subr.mxu0 0.0
        %950 = vmatpush1.msra.mxu0 0.0
        %951 = vmatprep.subr.mxu0 0.0
        %952 = vmatpush1.msra.mxu0 0.0
        %953 = vmatprep.subr.mxu0 0.0
        %954 = vmatpush1.msra.mxu0 0.0
        %955 = vmatprep.subr.mxu0 0.0
        %956 = vmatpush1.msra.mxu0 0.0
        %957 = vmatprep.subr.mxu0 0.0
        %958 = vmatpush1.msra.mxu0 0.0
        %959 = vmatprep.mubr.f32.mxu0 0.0
        %960 = vmatmul.mubr.f32.gmra.mrb[0].mxu0 %v893
        %v961 = vpop.f32.mrb[0].mxu0
        %v962 = vadd.f32 0.0, %v961
        %v963 = vpop.f32.mrb[0].mxu0
        %964 = vdwg.mxu0
        %s965 = scalar_lea.vmem %s212, 32 [#allocation9]
        %966 = vst.msk [vmem:[%s965] sm:$0xff] %vm216, %v962
        %s967 = scalar_lea.vmem %s182, 40 [#allocation3]
        %v968 = vld [vmem:[%s967] sm:$0xff]
        %v970 = vsel %vm216, %v968, 0
        %972 = vmatprep.subr.mxu0 0.0
        %973 = vmatpush1.xpose.msra.mxu0 %v970
        %974 = vmatprep.subr.mxu0 0.0
        %975 = vmatpush1.xpose.msra.mxu0 0.0
        %976 = vmatprep.subr.mxu0 0.0
        %977 = vmatpush1.xpose.msra.mxu0 0.0
        %978 = vmatprep.subr.mxu0 0.0
        %979 = vmatpush1.xpose.msra.mxu0 0.0
        %980 = vmatprep.subr.mxu0 0.0
        %981 = vmatpush1.xpose.msra.mxu0 0.0
        %982 = vmatprep.subr.mxu0 0.0
        %983 = vmatpush1.xpose.msra.mxu0 0.0
        %984 = vmatprep.subr.mxu0 0.0
        %985 = vmatpush1.xpose.msra.mxu0 0.0
        %986 = vmatprep.subr.mxu0 0.0
        %987 = vmatpush1.xpose.msra.mxu0 0.0
        %988 = vmatprep.subr.mxu0 0.0
        %989 = vmatpush1.xpose.msra.mxu0 0.0
        %990 = vmatprep.subr.mxu0 0.0
        %991 = vmatpush1.xpose.msra.mxu0 0.0
        %992 = vmatprep.subr.mxu0 0.0
        %993 = vmatpush1.xpose.msra.mxu0 0.0
        %994 = vmatprep.subr.mxu0 0.0
        %995 = vmatpush1.xpose.msra.mxu0 0.0
        %996 = vmatprep.subr.mxu0 0.0
        %997 = vmatpush1.xpose.msra.mxu0 0.0
        %998 = vmatprep.subr.mxu0 0.0
        %999 = vmatpush1.xpose.msra.mxu0 0.0
        %1000 = vmatprep.subr.mxu0 0.0
        %1001 = vmatpush1.xpose.msra.mxu0 0.0
        %1002 = vmatprep.subr.mxu0 0.0
        %1003 = vmatpush1.xpose.msra.mxu0 0.0
        %1004 = vmatprep.subr.mxu0 0.0
        %1005 = vmatpush1.xpose.msra.mxu0 0.0
        %1006 = vmatprep.subr.mxu0 0.0
        %1007 = vmatpush1.xpose.msra.mxu0 0.0
        %1008 = vmatprep.subr.mxu0 0.0
        %1009 = vmatpush1.xpose.msra.mxu0 0.0
        %1010 = vmatprep.subr.mxu0 0.0
        %1011 = vmatpush1.xpose.msra.mxu0 0.0
        %1012 = vmatprep.subr.mxu0 0.0
        %1013 = vmatpush1.xpose.msra.mxu0 0.0
        %1014 = vmatprep.subr.mxu0 0.0
        %1015 = vmatpush1.xpose.msra.mxu0 0.0
        %1016 = vmatprep.subr.mxu0 0.0
        %1017 = vmatpush1.xpose.msra.mxu0 0.0
        %1018 = vmatprep.subr.mxu0 0.0
        %1019 = vmatpush1.xpose.msra.mxu0 0.0
        %1020 = vmatprep.subr.mxu0 0.0
        %1021 = vmatpush1.xpose.msra.mxu0 0.0
        %1022 = vmatprep.subr.mxu0 0.0
        %1023 = vmatpush1.xpose.msra.mxu0 0.0
        %1024 = vmatprep.subr.mxu0 0.0
        %1025 = vmatpush1.xpose.msra.mxu0 0.0
        %1026 = vmatprep.subr.mxu0 0.0
        %1027 = vmatpush1.xpose.msra.mxu0 0.0
        %1028 = vmatprep.subr.mxu0 0.0
        %1029 = vmatpush1.xpose.msra.mxu0 0.0
        %1030 = vmatprep.subr.mxu0 0.0
        %1031 = vmatpush1.xpose.msra.mxu0 0.0
        %1032 = vmatprep.subr.mxu0 0.0
        %1033 = vmatpush1.xpose.msra.mxu0 0.0
        %1034 = vmatprep.subr.mxu0 0.0
        %1035 = vmatpush1.xpose.msra.mxu0 0.0
        %1036 = vmatprep.mubr.f32.mxu0 0.0
        %1037 = vmatmul.mubr.f32.gmra.mrb[0].mxu0 %v218
        %v1038 = vpop.f32.mrb[0].mxu0
        %v1039 = vadd.f32 0.0, %v1038
        %v1040 = vpop.f32.mrb[0].mxu0
        %1041 = vdwg.mxu0
        %v1043 = vsel %vm216, %v1039, 0
        %1045 = vmatprep.subr.mxu0 0.0
        %1046 = vmatpush1.msra.mxu0 %v214
        %1047 = vmatprep.subr.mxu0 0.0
        %1048 = vmatpush1.msra.mxu0 0.0
        %1049 = vmatprep.subr.mxu0 0.0
        %1050 = vmatpush1.msra.mxu0 0.0
        %1051 = vmatprep.subr.mxu0 0.0
        %1052 = vmatpush1.msra.mxu0 0.0
        %1053 = vmatprep.subr.mxu0 0.0
        %1054 = vmatpush1.msra.mxu0 0.0
        %1055 = vmatprep.subr.mxu0 0.0
        %1056 = vmatpush1.msra.mxu0 0.0
        %1057 = vmatprep.subr.mxu0 0.0
        %1058 = vmatpush1.msra.mxu0 0.0
        %1059 = vmatprep.subr.mxu0 0.0
        %1060 = vmatpush1.msra.mxu0 0.0
        %1061 = vmatprep.subr.mxu0 0.0
        %1062 = vmatpush1.msra.mxu0 0.0
        %1063 = vmatprep.subr.mxu0 0.0
        %1064 = vmatpush1.msra.mxu0 0.0
        %1065 = vmatprep.subr.mxu0 0.0
        %1066 = vmatpush1.msra.mxu0 0.0
        %1067 = vmatprep.subr.mxu0 0.0
        %1068 = vmatpush1.msra.mxu0 0.0
        %1069 = vmatprep.subr.mxu0 0.0
        %1070 = vmatpush1.msra.mxu0 0.0
        %1071 = vmatprep.subr.mxu0 0.0
        %1072 = vmatpush1.msra.mxu0 0.0
        %1073 = vmatprep.subr.mxu0 0.0
        %1074 = vmatpush1.msra.mxu0 0.0
        %1075 = vmatprep.subr.mxu0 0.0
        %1076 = vmatpush1.msra.mxu0 0.0
        %1077 = vmatprep.subr.mxu0 0.0
        %1078 = vmatpush1.msra.mxu0 0.0
        %1079 = vmatprep.subr.mxu0 0.0
        %1080 = vmatpush1.msra.mxu0 0.0
        %1081 = vmatprep.subr.mxu0 0.0
        %1082 = vmatpush1.msra.mxu0 0.0
        %1083 = vmatprep.subr.mxu0 0.0
        %1084 = vmatpush1.msra.mxu0 0.0
        %1085 = vmatprep.subr.mxu0 0.0
        %1086 = vmatpush1.msra.mxu0 0.0
        %1087 = vmatprep.subr.mxu0 0.0
        %1088 = vmatpush1.msra.mxu0 0.0
        %1089 = vmatprep.subr.mxu0 0.0
        %1090 = vmatpush1.msra.mxu0 0.0
        %1091 = vmatprep.subr.mxu0 0.0
        %1092 = vmatpush1.msra.mxu0 0.0
        %1093 = vmatprep.subr.mxu0 0.0
        %1094 = vmatpush1.msra.mxu0 0.0
        %1095 = vmatprep.subr.mxu0 0.0
        %1096 = vmatpush1.msra.mxu0 0.0
        %1097 = vmatprep.subr.mxu0 0.0
        %1098 = vmatpush1.msra.mxu0 0.0
        %1099 = vmatprep.subr.mxu0 0.0
        %1100 = vmatpush1.msra.mxu0 0.0
        %1101 = vmatprep.subr.mxu0 0.0
        %1102 = vmatpush1.msra.mxu0 0.0
        %1103 = vmatprep.subr.mxu0 0.0
        %1104 = vmatpush1.msra.mxu0 0.0
        %1105 = vmatprep.subr.mxu0 0.0
        %1106 = vmatpush1.msra.mxu0 0.0
        %1107 = vmatprep.subr.mxu0 0.0
        %1108 = vmatpush1.msra.mxu0 0.0
        %1109 = vmatprep.mubr.f32.mxu0 0.0
        %1110 = vmatmul.mubr.f32.gmra.mrb[0].mxu0 %v1043
        %v1111 = vpop.f32.mrb[0].mxu0
        %v1112 = vadd.f32 0.0, %v1111
        %v1113 = vpop.f32.mrb[0].mxu0
        %1114 = vdwg.mxu0
        %s1115 = scalar_lea.vmem %s212, 40 [#allocation9]
        %1116 = vst.msk [vmem:[%s1115] sm:$0xff] %vm216, %v1112
        %s1117 = scalar_lea.vmem %s182, 48 [#allocation3]
        %v1118 = vld [vmem:[%s1117] sm:$0xff]
        %v1120 = vsel %vm216, %v1118, 0
        %1122 = vmatprep.subr.mxu0 0.0
        %1123 = vmatpush1.xpose.msra.mxu0 %v1120
        %1124 = vmatprep.subr.mxu0 0.0
        %1125 = vmatpush1.xpose.msra.mxu0 0.0
        %1126 = vmatprep.subr.mxu0 0.0
        %1127 = vmatpush1.xpose.msra.mxu0 0.0
        %1128 = vmatprep.subr.mxu0 0.0
        %1129 = vmatpush1.xpose.msra.mxu0 0.0
        %1130 = vmatprep.subr.mxu0 0.0
        %1131 = vmatpush1.xpose.msra.mxu0 0.0
        %1132 = vmatprep.subr.mxu0 0.0
        %1133 = vmatpush1.xpose.msra.mxu0 0.0
        %1134 = vmatprep.subr.mxu0 0.0
        %1135 = vmatpush1.xpose.msra.mxu0 0.0
        %1136 = vmatprep.subr.mxu0 0.0
        %1137 = vmatpush1.xpose.msra.mxu0 0.0
        %1138 = vmatprep.subr.mxu0 0.0
        %1139 = vmatpush1.xpose.msra.mxu0 0.0
        %1140 = vmatprep.subr.mxu0 0.0
        %1141 = vmatpush1.xpose.msra.mxu0 0.0
        %1142 = vmatprep.subr.mxu0 0.0
        %1143 = vmatpush1.xpose.msra.mxu0 0.0
        %1144 = vmatprep.subr.mxu0 0.0
        %1145 = vmatpush1.xpose.msra.mxu0 0.0
        %1146 = vmatprep.subr.mxu0 0.0
        %1147 = vmatpush1.xpose.msra.mxu0 0.0
        %1148 = vmatprep.subr.mxu0 0.0
        %1149 = vmatpush1.xpose.msra.mxu0 0.0
        %1150 = vmatprep.subr.mxu0 0.0
        %1151 = vmatpush1.xpose.msra.mxu0 0.0
        %1152 = vmatprep.subr.mxu0 0.0
        %1153 = vmatpush1.xpose.msra.mxu0 0.0
        %1154 = vmatprep.subr.mxu0 0.0
        %1155 = vmatpush1.xpose.msra.mxu0 0.0
        %1156 = vmatprep.subr.mxu0 0.0
        %1157 = vmatpush1.xpose.msra.mxu0 0.0
        %1158 = vmatprep.subr.mxu0 0.0
        %1159 = vmatpush1.xpose.msra.mxu0 0.0
        %1160 = vmatprep.subr.mxu0 0.0
        %1161 = vmatpush1.xpose.msra.mxu0 0.0
        %1162 = vmatprep.subr.mxu0 0.0
        %1163 = vmatpush1.xpose.msra.mxu0 0.0
        %1164 = vmatprep.subr.mxu0 0.0
        %1165 = vmatpush1.xpose.msra.mxu0 0.0
        %1166 = vmatprep.subr.mxu0 0.0
        %1167 = vmatpush1.xpose.msra.mxu0 0.0
        %1168 = vmatprep.subr.mxu0 0.0
        %1169 = vmatpush1.xpose.msra.mxu0 0.0
        %1170 = vmatprep.subr.mxu0 0.0
        %1171 = vmatpush1.xpose.msra.mxu0 0.0
        %1172 = vmatprep.subr.mxu0 0.0
        %1173 = vmatpush1.xpose.msra.mxu0 0.0
        %1174 = vmatprep.subr.mxu0 0.0
        %1175 = vmatpush1.xpose.msra.mxu0 0.0
        %1176 = vmatprep.subr.mxu0 0.0
        %1177 = vmatpush1.xpose.msra.mxu0 0.0
        %1178 = vmatprep.subr.mxu0 0.0
        %1179 = vmatpush1.xpose.msra.mxu0 0.0
        %1180 = vmatprep.subr.mxu0 0.0
        %1181 = vmatpush1.xpose.msra.mxu0 0.0
        %1182 = vmatprep.subr.mxu0 0.0
        %1183 = vmatpush1.xpose.msra.mxu0 0.0
        %1184 = vmatprep.subr.mxu0 0.0
        %1185 = vmatpush1.xpose.msra.mxu0 0.0
        %1186 = vmatprep.mubr.f32.mxu0 0.0
        %1187 = vmatmul.mubr.f32.gmra.mrb[0].mxu0 %v218
        %v1188 = vpop.f32.mrb[0].mxu0
        %v1189 = vadd.f32 0.0, %v1188
        %v1190 = vpop.f32.mrb[0].mxu0
        %1191 = vdwg.mxu0
        %v1193 = vsel %vm216, %v1189, 0
        %1195 = vmatprep.subr.mxu0 0.0
        %1196 = vmatpush1.msra.mxu0 %v214
        %1197 = vmatprep.subr.mxu0 0.0
        %1198 = vmatpush1.msra.mxu0 0.0
        %1199 = vmatprep.subr.mxu0 0.0
        %1200 = vmatpush1.msra.mxu0 0.0
        %1201 = vmatprep.subr.mxu0 0.0
        %1202 = vmatpush1.msra.mxu0 0.0
        %1203 = vmatprep.subr.mxu0 0.0
        %1204 = vmatpush1.msra.mxu0 0.0
        %1205 = vmatprep.subr.mxu0 0.0
        %1206 = vmatpush1.msra.mxu0 0.0
        %1207 = vmatprep.subr.mxu0 0.0
        %1208 = vmatpush1.msra.mxu0 0.0
        %1209 = vmatprep.subr.mxu0 0.0
        %1210 = vmatpush1.msra.mxu0 0.0
        %1211 = vmatprep.subr.mxu0 0.0
        %1212 = vmatpush1.msra.mxu0 0.0
        %1213 = vmatprep.subr.mxu0 0.0
        %1214 = vmatpush1.msra.mxu0 0.0
        %1215 = vmatprep.subr.mxu0 0.0
        %1216 = vmatpush1.msra.mxu0 0.0
        %1217 = vmatprep.subr.mxu0 0.0
        %1218 = vmatpush1.msra.mxu0 0.0
        %1219 = vmatprep.subr.mxu0 0.0
        %1220 = vmatpush1.msra.mxu0 0.0
        %1221 = vmatprep.subr.mxu0 0.0
        %1222 = vmatpush1.msra.mxu0 0.0
        %1223 = vmatprep.subr.mxu0 0.0
        %1224 = vmatpush1.msra.mxu0 0.0
        %1225 = vmatprep.subr.mxu0 0.0
        %1226 = vmatpush1.msra.mxu0 0.0
        %1227 = vmatprep.subr.mxu0 0.0
        %1228 = vmatpush1.msra.mxu0 0.0
        %1229 = vmatprep.subr.mxu0 0.0
        %1230 = vmatpush1.msra.mxu0 0.0
        %1231 = vmatprep.subr.mxu0 0.0
        %1232 = vmatpush1.msra.mxu0 0.0
        %1233 = vmatprep.subr.mxu0 0.0
        %1234 = vmatpush1.msra.mxu0 0.0
        %1235 = vmatprep.subr.mxu0 0.0
        %1236 = vmatpush1.msra.mxu0 0.0
        %1237 = vmatprep.subr.mxu0 0.0
        %1238 = vmatpush1.msra.mxu0 0.0
        %1239 = vmatprep.subr.mxu0 0.0
        %1240 = vmatpush1.msra.mxu0 0.0
        %1241 = vmatprep.subr.mxu0 0.0
        %1242 = vmatpush1.msra.mxu0 0.0
        %1243 = vmatprep.subr.mxu0 0.0
        %1244 = vmatpush1.msra.mxu0 0.0
        %1245 = vmatprep.subr.mxu0 0.0
        %1246 = vmatpush1.msra.mxu0 0.0
        %1247 = vmatprep.subr.mxu0 0.0
        %1248 = vmatpush1.msra.mxu0 0.0
        %1249 = vmatprep.subr.mxu0 0.0
        %1250 = vmatpush1.msra.mxu0 0.0
        %1251 = vmatprep.subr.mxu0 0.0
        %1252 = vmatpush1.msra.mxu0 0.0
        %1253 = vmatprep.subr.mxu0 0.0
        %1254 = vmatpush1.msra.mxu0 0.0
        %1255 = vmatprep.subr.mxu0 0.0
        %1256 = vmatpush1.msra.mxu0 0.0
        %1257 = vmatprep.subr.mxu0 0.0
        %1258 = vmatpush1.msra.mxu0 0.0
        %1259 = vmatprep.mubr.f32.mxu0 0.0
        %1260 = vmatmul.mubr.f32.gmra.mrb[0].mxu0 %v1193
        %v1261 = vpop.f32.mrb[0].mxu0
        %v1262 = vadd.f32 0.0, %v1261
        %v1263 = vpop.f32.mrb[0].mxu0
        %1264 = vdwg.mxu0
        %s1265 = scalar_lea.vmem %s212, 48 [#allocation9]
        %1266 = vst.msk [vmem:[%s1265] sm:$0xff] %vm216, %v1262
        %s1267 = scalar_lea.vmem %s182, 56 [#allocation3]
        %v1268 = vld [vmem:[%s1267] sm:$0xff]
        %v1270 = vsel %vm216, %v1268, 0
        %1272 = vmatprep.subr.mxu0 0.0
        %1273 = vmatpush1.xpose.msra.mxu0 %v1270
        %1274 = vmatprep.subr.mxu0 0.0
        %1275 = vmatpush1.xpose.msra.mxu0 0.0
        %1276 = vmatprep.subr.mxu0 0.0
        %1277 = vmatpush1.xpose.msra.mxu0 0.0
        %1278 = vmatprep.subr.mxu0 0.0
        %1279 = vmatpush1.xpose.msra.mxu0 0.0
        %1280 = vmatprep.subr.mxu0 0.0
        %1281 = vmatpush1.xpose.msra.mxu0 0.0
        %1282 = vmatprep.subr.mxu0 0.0
        %1283 = vmatpush1.xpose.msra.mxu0 0.0
        %1284 = vmatprep.subr.mxu0 0.0
        %1285 = vmatpush1.xpose.msra.mxu0 0.0
        %1286 = vmatprep.subr.mxu0 0.0
        %1287 = vmatpush1.xpose.msra.mxu0 0.0
        %1288 = vmatprep.subr.mxu0 0.0
        %1289 = vmatpush1.xpose.msra.mxu0 0.0
        %1290 = vmatprep.subr.mxu0 0.0
        %1291 = vmatpush1.xpose.msra.mxu0 0.0
        %1292 = vmatprep.subr.mxu0 0.0
        %1293 = vmatpush1.xpose.msra.mxu0 0.0
        %1294 = vmatprep.subr.mxu0 0.0
        %1295 = vmatpush1.xpose.msra.mxu0 0.0
        %1296 = vmatprep.subr.mxu0 0.0
        %1297 = vmatpush1.xpose.msra.mxu0 0.0
        %1298 = vmatprep.subr.mxu0 0.0
        %1299 = vmatpush1.xpose.msra.mxu0 0.0
        %1300 = vmatprep.subr.mxu0 0.0
        %1301 = vmatpush1.xpose.msra.mxu0 0.0
        %1302 = vmatprep.subr.mxu0 0.0
        %1303 = vmatpush1.xpose.msra.mxu0 0.0
        %1304 = vmatprep.subr.mxu0 0.0
        %1305 = vmatpush1.xpose.msra.mxu0 0.0
        %1306 = vmatprep.subr.mxu0 0.0
        %1307 = vmatpush1.xpose.msra.mxu0 0.0
        %1308 = vmatprep.subr.mxu0 0.0
        %1309 = vmatpush1.xpose.msra.mxu0 0.0
        %1310 = vmatprep.subr.mxu0 0.0
        %1311 = vmatpush1.xpose.msra.mxu0 0.0
        %1312 = vmatprep.subr.mxu0 0.0
        %1313 = vmatpush1.xpose.msra.mxu0 0.0
        %1314 = vmatprep.subr.mxu0 0.0
        %1315 = vmatpush1.xpose.msra.mxu0 0.0
        %1316 = vmatprep.subr.mxu0 0.0
        %1317 = vmatpush1.xpose.msra.mxu0 0.0
        %1318 = vmatprep.subr.mxu0 0.0
        %1319 = vmatpush1.xpose.msra.mxu0 0.0
        %1320 = vmatprep.subr.mxu0 0.0
        %1321 = vmatpush1.xpose.msra.mxu0 0.0
        %1322 = vmatprep.subr.mxu0 0.0
        %1323 = vmatpush1.xpose.msra.mxu0 0.0
        %1324 = vmatprep.subr.mxu0 0.0
        %1325 = vmatpush1.xpose.msra.mxu0 0.0
        %1326 = vmatprep.subr.mxu0 0.0
        %1327 = vmatpush1.xpose.msra.mxu0 0.0
        %1328 = vmatprep.subr.mxu0 0.0
        %1329 = vmatpush1.xpose.msra.mxu0 0.0
        %1330 = vmatprep.subr.mxu0 0.0
        %1331 = vmatpush1.xpose.msra.mxu0 0.0
        %1332 = vmatprep.subr.mxu0 0.0
        %1333 = vmatpush1.xpose.msra.mxu0 0.0
        %1334 = vmatprep.subr.mxu0 0.0
        %1335 = vmatpush1.xpose.msra.mxu0 0.0
        %1336 = vmatprep.mubr.f32.mxu0 0.0
        %1337 = vmatmul.mubr.f32.gmra.mrb[0].mxu0 %v218
        %v1338 = vpop.f32.mrb[0].mxu0
        %v1339 = vadd.f32 0.0, %v1338
        %v1340 = vpop.f32.mrb[0].mxu0
        %1341 = vdwg.mxu0
        %v1343 = vsel %vm216, %v1339, 0
        %1345 = vmatprep.subr.mxu0 0.0
        %1346 = vmatpush1.msra.mxu0 %v214
        %1347 = vmatprep.subr.mxu0 0.0
        %1348 = vmatpush1.msra.mxu0 0.0
        %1349 = vmatprep.subr.mxu0 0.0
        %1350 = vmatpush1.msra.mxu0 0.0
        %1351 = vmatprep.subr.mxu0 0.0
        %1352 = vmatpush1.msra.mxu0 0.0
        %1353 = vmatprep.subr.mxu0 0.0
        %1354 = vmatpush1.msra.mxu0 0.0
        %1355 = vmatprep.subr.mxu0 0.0
        %1356 = vmatpush1.msra.mxu0 0.0
        %1357 = vmatprep.subr.mxu0 0.0
        %1358 = vmatpush1.msra.mxu0 0.0
        %1359 = vmatprep.subr.mxu0 0.0
        %1360 = vmatpush1.msra.mxu0 0.0
        %1361 = vmatprep.subr.mxu0 0.0
        %1362 = vmatpush1.msra.mxu0 0.0
        %1363 = vmatprep.subr.mxu0 0.0
        %1364 = vmatpush1.msra.mxu0 0.0
        %1365 = vmatprep.subr.mxu0 0.0
        %1366 = vmatpush1.msra.mxu0 0.0
        %1367 = vmatprep.subr.mxu0 0.0
        %1368 = vmatpush1.msra.mxu0 0.0
        %1369 = vmatprep.subr.mxu0 0.0
        %1370 = vmatpush1.msra.mxu0 0.0
        %1371 = vmatprep.subr.mxu0 0.0
        %1372 = vmatpush1.msra.mxu0 0.0
        %1373 = vmatprep.subr.mxu0 0.0
        %1374 = vmatpush1.msra.mxu0 0.0
        %1375 = vmatprep.subr.mxu0 0.0
        %1376 = vmatpush1.msra.mxu0 0.0
        %1377 = vmatprep.subr.mxu0 0.0
        %1378 = vmatpush1.msra.mxu0 0.0
        %1379 = vmatprep.subr.mxu0 0.0
        %1380 = vmatpush1.msra.mxu0 0.0
        %1381 = vmatprep.subr.mxu0 0.0
        %1382 = vmatpush1.msra.mxu0 0.0
        %1383 = vmatprep.subr.mxu0 0.0
        %1384 = vmatpush1.msra.mxu0 0.0
        %1385 = vmatprep.subr.mxu0 0.0
        %1386 = vmatpush1.msra.mxu0 0.0
        %1387 = vmatprep.subr.mxu0 0.0
        %1388 = vmatpush1.msra.mxu0 0.0
        %1389 = vmatprep.subr.mxu0 0.0
        %1390 = vmatpush1.msra.mxu0 0.0
        %1391 = vmatprep.subr.mxu0 0.0
        %1392 = vmatpush1.msra.mxu0 0.0
        %1393 = vmatprep.subr.mxu0 0.0
        %1394 = vmatpush1.msra.mxu0 0.0
        %1395 = vmatprep.subr.mxu0 0.0
        %1396 = vmatpush1.msra.mxu0 0.0
        %1397 = vmatprep.subr.mxu0 0.0
        %1398 = vmatpush1.msra.mxu0 0.0
        %1399 = vmatprep.subr.mxu0 0.0
        %1400 = vmatpush1.msra.mxu0 0.0
        %1401 = vmatprep.subr.mxu0 0.0
        %1402 = vmatpush1.msra.mxu0 0.0
        %1403 = vmatprep.subr.mxu0 0.0
        %1404 = vmatpush1.msra.mxu0 0.0
        %1405 = vmatprep.subr.mxu0 0.0
        %1406 = vmatpush1.msra.mxu0 0.0
        %1407 = vmatprep.subr.mxu0 0.0
        %1408 = vmatpush1.msra.mxu0 0.0
        %1409 = vmatprep.mubr.f32.mxu0 0.0
        %1410 = vmatmul.mubr.f32.gmra.mrb[0].mxu0 %v1343
        %v1411 = vpop.f32.mrb[0].mxu0
        %v1412 = vadd.f32 0.0, %v1411
        %v1413 = vpop.f32.mrb[0].mxu0
        %1414 = vdwg.mxu0
        %s1415 = scalar_lea.vmem %s212, 56 [#allocation9]
        %1416 = vst.msk [vmem:[%s1415] sm:$0xff] %vm216, %v1412
        %s1417 = sand.u32 %s97, 1
        %s1418 = scalar_lea.sflag [#allocation5], %s1417
        %s1419 = sand.u32 %s97, 1
        %s1420 = smul.addr %s1419, 64
        %s1421 = scalar_lea.vmem [#allocation9], %s1420
        // Predicated region
        $region45: #{fn.1} parent=31 // pred_check
          %p1422 = pneg %p107
        $region46: #{fn.1} parent=31 // pred_check_branch
          %1424 = sbr.rel (%p1422) target = $region48
        $region47: #{fn.1} parent=31 // pred_region
          %s1426 = ssub.s32 1024, 1024
          %1427 = vsyncadd %s1418, %s1426
          %s1428 = smul.addr %s21, 128
          %s1429 = scalar_lea.hbm %s3, %s1428
          %s1430 = sshll.u32 %s1421, 4
          %s1431 = int_to_ptr.vmem [resolvable:$true] %s1430
          %1436 = dma.vmem_to_hbm [thread:$0]  %s1431, 1024, %s1429, %s1418, 128, 1024, 8
        $region48: #{fn.1} parent=31 // pred_fallthru
          _
      $region32: #{fn.1} parent=5 // pred_fallthru
        _
      %p1437 = scmp.le.s32.totalorder 2, %s16
      // Predicated region
      $region49: #{fn.1} parent=5 // pred_check
        %p1438 = pneg %p1437
      $region50: #{fn.1} parent=5 // pred_check_branch
        %1440 = sbr.rel (%p1438) target = $region52
      $region51: #{fn.1} parent=5 // pred_region
        %s1441 = ssub.s32 %s16, 2
        // Predicated region
        $region53: #{fn.1} parent=51 // pred_check
          %p1442 = pneg %p113
        $region54: #{fn.1} parent=51 // pred_check_branch
          %1444 = sbr.rel (%p1442) target = $region56
        $region55: #{fn.1} parent=51 // pred_region
          %s1445 = sand.u32 %s98, 1
          %s1446 = scalar_lea.sflag [#allocation5], %s1445
          %s1447 = sand.u32 %s98, 1
          %s1448 = smul.addr %s1447, 64
          %s1449 = scalar_lea.vmem [#allocation9], %s1448
          %1450 = dma.done %s1446, 1024
        $region56: #{fn.1} parent=51 // pred_fallthru
          _
      $region52: #{fn.1} parent=5 // pred_fallthru
        _
    $region6: #{fn.1} parent=1 // loop_footer
      %s20 = sadd.s32 1, %s16
    $region7: #{fn.1} parent=1 // loop_footer_branch
      %15 = sbr.rel target = $region3
    $region8: #{fn.1} parent=1 // loop_exit
      _
    %1451 = vsyncpa [#allocation4], 1
    %s1452 = scalar_lea.sflag [#allocation4], 1
    %1453 = vsyncpa %s1452, 1
    %1454 = vsyncpa [#allocation7], 1
    %1455 = vsyncpa [#allocation5], 1
    %s1456 = scalar_lea.sflag [#allocation5], 1
    %1457 = vsyncpa %s1456, 1

</llo_original>
